<compile_context>
chip_gen: v7x
topology: tpu7x:2x2x1
jax: 0.10.0
libtpu: 0.0.40
codegen_flags: <defaults>
</compile_context>

<pallas_src>
import functools

import jax
import jax.numpy as jnp
from jax import lax
from jax.experimental import pallas as pl
from jax.experimental.pallas import tpu as pltpu


def mean_conv1x1_kernel(x_ref, w_ref, b_ref, o_ref):
    # x_ref: (C_in, H*W) f32      w_ref: (C_out_blk, C_in) bf16 (or f32)
    # b_ref: (C_out_blk, 1) f32   o_ref: (C_out_blk, 1) f32
    #
    # MXU contraction (C_out_blk, C_in) @ (C_in, H*W), both operands in their
    # native (non-transposed) layouts, explicit bf16 inputs, f32 accumulation.
    x_bf = x_ref[...].astype(jnp.bfloat16)
    w_bf = w_ref[...].astype(jnp.bfloat16)
    y = lax.dot_general(
        w_bf, x_bf,
        dimension_numbers=(((1,), (0,)), ((), ())),
        preferred_element_type=jnp.float32,
    )
    # Spatial mean commutes with the (linear) 1x1 conv: lane-reduce the
    # (C_out_blk, H*W) result over the H*W positions and apply the 1/(H*W)
    # scale once on the small pooled vector, then add bias in f32.
    inv_hw = 1.0 / x_ref.shape[1]
    o_ref[...] = jnp.sum(y, axis=1, keepdims=True) * inv_hw + b_ref[...]


@functools.partial(jax.jit, static_argnames=("num_cores",))
def mean_conv2d_1x1(x, weight, bias, *, num_cores=1):
    """x: (1, C_in, H, W) f32, weight: (C_out, C_in, 1, 1), bias: (C_out,).

    Returns (1, C_out, 1, 1), matching
      Conv2d(C_in, C_out, 1)(x.mean((2, 3), keepdim=True)).
    """
    n, c_in, h, w = x.shape
    assert n == 1, "module is defined for batch size 1"
    c_out = weight.shape[0]
    hw = h * w

    # Only split C_out across cores if each block stays sublane-aligned.
    if c_out % num_cores != 0 or (c_out // num_cores) % 8 != 0:
        num_cores = 1
    c_blk = c_out // num_cores

    x_2d = x.reshape(c_in, hw)                        # free contiguous view
    w_2d = weight.reshape(c_out, c_in)                # free contiguous view
    b_2d = bias.reshape(c_out, 1).astype(jnp.float32)

    out = pl.pallas_call(
        mean_conv1x1_kernel,
        out_shape=jax.ShapeDtypeStruct((c_out, 1), jnp.float32),
        grid=(num_cores,),
        in_specs=[
            # x: same block every step -> DMA'd once, stays resident.
            pl.BlockSpec((c_in, hw), lambda i: (0, 0)),
            pl.BlockSpec((c_blk, c_in), lambda i: (i, 0)),
            pl.BlockSpec((c_blk, 1), lambda i: (i, 0)),
        ],
        out_specs=pl.BlockSpec((c_blk, 1), lambda i: (i, 0)),
        compiler_params=pltpu.CompilerParams(
            dimension_semantics=("parallel",),
        ),
    )(x_2d, w_2d, b_2d)

    return out.reshape(1, c_out, 1, 1)


def _num_parallel_cores():
    # v7x has 2 TensorCores per chip; v5e/v6e have 1.  Gate the 2-way C_out
    # split so single-TC chips do not pay an extra grid step (~0.35 us) on a
    # ~1 us kernel.
    try:
        kind = jax.devices()[0].device_kind.lower()
    except Exception:
        return 1
    if "v7" in kind or "tpu7" in kind or "7x" in kind:
        return 2
    return 1


if __name__ == "__main__":
    # Shapes from the module: input (1, 3072, 7, 7), Conv2d(3072 -> 128, 1x1).
    N, C_IN, H, W = 1, 3072, 7, 7
    C_OUT = 128

    key = jax.random.PRNGKey(0)
    kx, kw, kb = jax.random.split(key, 3)

    x = jax.random.normal(kx, (N, C_IN, H, W), dtype=jnp.float32)
    # Deterministic parameter init (synthetic; roughly PyTorch's fan-in scale).
    bound = 1.0 / (C_IN ** 0.5)
    weight_f32 = jax.random.uniform(kw, (C_OUT, C_IN, 1, 1), jnp.float32, -bound, bound)
    bias = jax.random.uniform(kb, (C_OUT,), jnp.float32, -bound, bound)

    # One-time bf16 weight cast at parameter-load time (outside the jitted
    # hot path): halves the dominant HBM stream of this HBM-bound kernel.
    weight_bf16 = weight_f32.astype(jnp.bfloat16)

    num_cores = _num_parallel_cores()
    out = mean_conv2d_1x1(x, weight_bf16, bias, num_cores=num_cores)
    out = jax.block_until_ready(out)

    # Pure-JAX f32 reference for sanity (bf16 matmul operands => ~1e-3 rel err).
    ref_mean = x.mean(axis=(2, 3), keepdims=True)                 # (1, C_in, 1, 1)
    ref = (jnp.einsum("ncij,ocij->noij", ref_mean, weight_f32)
           + bias.reshape(1, C_OUT, 1, 1))
    assert out.shape == (1, C_OUT, 1, 1)
    max_err = float(jnp.max(jnp.abs(out - ref)))
    assert jnp.allclose(out, ref, atol=2e-2, rtol=2e-2), f"max_abs_err={max_err}"

    print("KERNEL_OK")
</pallas_src>

<mosaic_0001>
module attributes {stable_mosaic.version = 11 : i64} {
  func.func @mean_conv1x1_kernel(%arg0: i32, %arg1: memref<3072x49xf32, #tpu.memory_space<vmem>>, %arg2: memref<128x3072xbf16, #tpu.memory_space<vmem>>, %arg3: memref<128x1xf32, #tpu.memory_space<vmem>>, %arg4: memref<128x1xf32, #tpu.memory_space<vmem>>) attributes {dimension_semantics = [#tpu.dimension_semantics<parallel>], iteration_bounds = array<i64: 1>, scalar_prefetch = 0 : i64, scratch_operands = 0 : i64, tpu.core_type = #tpu.core_type<tc>, window_params = [{pipeline_mode = #tpu.pipeline_mode<synchronous>, transform_indices = @transform_0, window_bounds = array<i64: 3072, 49>}, {transform_indices = @transform_1, window_bounds = array<i64: 128, 3072>}, {transform_indices = @transform_2, window_bounds = array<i64: 128, 1>}, {transform_indices = @transform_3, window_bounds = array<i64: 128, 1>}]} {
    %c0 = arith.constant 0 : index
    %c0_0 = arith.constant 0 : index
    %0 = vector.load %arg1[%c0, %c0_0] : memref<3072x49xf32, #tpu.memory_space<vmem>>, vector<3072x49xf32>
    %1 = arith.truncf %0 : vector<3072x49xf32> to vector<3072x49xbf16>
    %c0_1 = arith.constant 0 : index
    %c0_2 = arith.constant 0 : index
    %2 = vector.load %arg2[%c0_1, %c0_2] : memref<128x3072xbf16, #tpu.memory_space<vmem>>, vector<128x3072xbf16>
    %cst = arith.constant dense<0.000000e+00> : vector<128x49xf32>
    %3 = tpu.matmul %2, %1, %cst {dimension_numbers = #tpu.dot_dimension_numbers<[1], [0], [0], [1], [0, 0, 1, 1], [], []>} : vector<128x3072xbf16>, vector<3072x49xbf16>, vector<128x49xf32> -> vector<128x49xf32>
    %cst_3 = arith.constant dense<0.000000e+00> : vector<128xf32>
    %4 = vector.multi_reduction <add>, %3, %cst_3 [1] : vector<128x49xf32> to vector<128xf32>
    %5 = vector.shape_cast %4 : vector<128xf32> to vector<128x1xf32>
    %cst_4 = arith.constant 0.0204081628 : f32
    %6 = vector.broadcast %cst_4 : f32 to vector<128x1xf32>
    %7 = arith.mulf %5, %6 : vector<128x1xf32>
    %c0_5 = arith.constant 0 : index
    %c0_6 = arith.constant 0 : index
    %8 = vector.load %arg3[%c0_5, %c0_6] : memref<128x1xf32, #tpu.memory_space<vmem>>, vector<128x1xf32>
    %9 = arith.addf %7, %8 : vector<128x1xf32>
    %c0_7 = arith.constant 0 : index
    %c0_8 = arith.constant 0 : index
    %10 = vector.load %arg4[%c0_7, %c0_8] : memref<128x1xf32, #tpu.memory_space<vmem>>, vector<128x1xf32>
    tpu.vector_store %arg4[%c0_7, %c0_8], %9 {strides = array<i32>} : memref<128x1xf32, #tpu.memory_space<vmem>>, vector<128x1xf32>,
    return
  }
  func.func @transform_0(%arg0: i32) -> (i32, i32) {
    %c0_i32 = arith.constant 0 : i32
    %c0_i32_0 = arith.constant 0 : i32
    %c0_i32_1 = arith.constant 0 : i32
    return %c0_i32, %c0_i32_0 : i32, i32
  }
  func.func @transform_1(%arg0: i32) -> (i32, i32) {
    %c0_i32 = arith.constant 0 : i32
    %c0_i32_0 = arith.constant 0 : i32
    return %arg0, %c0_i32 : i32, i32
  }
  func.func @transform_2(%arg0: i32) -> (i32, i32) {
    %c0_i32 = arith.constant 0 : i32
    %c0_i32_0 = arith.constant 0 : i32
    return %arg0, %c0_i32 : i32, i32
  }
  func.func @transform_3(%arg0: i32) -> (i32, i32) {
    %c0_i32 = arith.constant 0 : i32
    %c0_i32_0 = arith.constant 0 : i32
    return %arg0, %c0_i32 : i32, i32
  }
}

</mosaic_0001>

<llo_original>
// kernel: mean_conv2d_1x1.1
$region0: #{mean_conv2d_1x1.1}
  #allocation0 [shape = 'u32[]', space=smem, size = 0x4, offset = 0x4, fixed_abs, tag = 'smem constant byte address 0x4 - core index']
  #allocation1 [shape = 'u32[144,128]{1,0:T(1,128)}', space=vmem, size = 0x12000, scoped, tag = 'internal scratch']
  %s0 = inlined_call_operand.vmem [shape: f32[3072,49], index: 0, kind: input, shape index: {}]
  %s1 = inlined_call_operand.vmem [shape: bf16[128,3072], index: 1, kind: input, shape index: {}]
  %s2 = inlined_call_operand.vmem [shape: f32[128,1], index: 2, kind: input, shape index: {}]
  %s3 = inlined_call_operand.vmem [shape: f32[128,1], index: 3, kind: output, shape index: {}]
  %s4 = sld [smem:[#allocation0]]
  $region22: #{mean_conv2d_1x1.1} parent=0
    _
  %s6 = ssub.s32 1, %s4
  %s7 = scalar_select 0, %s6, %s4
  // Predicated region
  $region2: #{mean_conv2d_1x1.1} parent=0 // pred_check
    _
  $region3: #{mean_conv2d_1x1.1} parent=0 // pred_check_branch
    %9 = sbr.rel (0) target = $region5
  $region4: #{mean_conv2d_1x1.1} parent=0 // pred_region
    _
  $region5: #{mean_conv2d_1x1.1} parent=0 // pred_fallthru
    _
  // Predicated region
  $region6: #{mean_conv2d_1x1.1} parent=0 // pred_check
    _
  $region7: #{mean_conv2d_1x1.1} parent=0 // pred_check_branch
    %11 = sbr.rel (0) target = $region9
  $region8: #{mean_conv2d_1x1.1} parent=0 // pred_region
    _
  $region9: #{mean_conv2d_1x1.1} parent=0 // pred_fallthru
    _
  // Predicated region
  $region10: #{mean_conv2d_1x1.1} parent=0 // pred_check
    _
  $region11: #{mean_conv2d_1x1.1} parent=0 // pred_check_branch
    %13 = sbr.rel (0) target = $region13
  $region12: #{mean_conv2d_1x1.1} parent=0 // pred_region
    _
  $region13: #{mean_conv2d_1x1.1} parent=0 // pred_fallthru
    _
  %v15 = vld [vmem:[%s0] sm:$0xff]
  %v16 = vld [vmem:[%s0 + $0x8] sm:$0xff]
  %v17 = vld [vmem:[%s0 + $0x10] sm:$0xff]
  %v18 = vld [vmem:[%s0 + $0x18] sm:$0xff]
  %v19 = vld [vmem:[%s0 + $0x20] sm:$0xff]
  %v20 = vld [vmem:[%s0 + $0x28] sm:$0xff]
  %v21 = vld [vmem:[%s0 + $0x30] sm:$0xff]
  %v22 = vld [vmem:[%s0 + $0x38] sm:$0xff]
  %v23 = vld [vmem:[%s0 + $0x40] sm:$0xff]
  %v24 = vld [vmem:[%s0 + $0x48] sm:$0xff]
  %v25 = vld [vmem:[%s0 + $0x50] sm:$0xff]
  %v26 = vld [vmem:[%s0 + $0x58] sm:$0xff]
  %v27 = vld [vmem:[%s0 + $0x60] sm:$0xff]
  %v28 = vld [vmem:[%s0 + $0x68] sm:$0xff]
  %v29 = vld [vmem:[%s0 + $0x70] sm:$0xff]
  %v30 = vld [vmem:[%s0 + $0x78] sm:$0xff]
  %v31 = vld [vmem:[%s0 + $0x80] sm:$0xff]
  %v32 = vld [vmem:[%s0 + $0x88] sm:$0xff]
  %v33 = vld [vmem:[%s0 + $0x90] sm:$0xff]
  %v34 = vld [vmem:[%s0 + $0x98] sm:$0xff]
  %v35 = vld [vmem:[%s0 + $0xa0] sm:$0xff]
  %v36 = vld [vmem:[%s0 + $0xa8] sm:$0xff]
  %v37 = vld [vmem:[%s0 + $0xb0] sm:$0xff]
  %v38 = vld [vmem:[%s0 + $0xb8] sm:$0xff]
  %v39 = vld [vmem:[%s0 + $0xc0] sm:$0xff]
  %v40 = vld [vmem:[%s0 + $0xc8] sm:$0xff]
  %v41 = vld [vmem:[%s0 + $0xd0] sm:$0xff]
  %v42 = vld [vmem:[%s0 + $0xd8] sm:$0xff]
  %v43 = vld [vmem:[%s0 + $0xe0] sm:$0xff]
  %v44 = vld [vmem:[%s0 + $0xe8] sm:$0xff]
  %v45 = vld [vmem:[%s0 + $0xf0] sm:$0xff]
  %v46 = vld [vmem:[%s0 + $0xf8] sm:$0xff]
  %v47 = vld [vmem:[%s0 + $0x100] sm:$0xff]
  %v48 = vld [vmem:[%s0 + $0x108] sm:$0xff]
  %v49 = vld [vmem:[%s0 + $0x110] sm:$0xff]
  %v50 = vld [vmem:[%s0 + $0x118] sm:$0xff]
  %v51 = vld [vmem:[%s0 + $0x120] sm:$0xff]
  %v52 = vld [vmem:[%s0 + $0x128] sm:$0xff]
  %v53 = vld [vmem:[%s0 + $0x130] sm:$0xff]
  %v54 = vld [vmem:[%s0 + $0x138] sm:$0xff]
  %v55 = vld [vmem:[%s0 + $0x140] sm:$0xff]
  %v56 = vld [vmem:[%s0 + $0x148] sm:$0xff]
  %v57 = vld [vmem:[%s0 + $0x150] sm:$0xff]
  %v58 = vld [vmem:[%s0 + $0x158] sm:$0xff]
  %v59 = vld [vmem:[%s0 + $0x160] sm:$0xff]
  %v60 = vld [vmem:[%s0 + $0x168] sm:$0xff]
  %v61 = vld [vmem:[%s0 + $0x170] sm:$0xff]
  %v62 = vld [vmem:[%s0 + $0x178] sm:$0xff]
  %v63 = vld [vmem:[%s0 + $0x180] sm:$0xff]
  %v64 = vld [vmem:[%s0 + $0x188] sm:$0xff]
  %v65 = vld [vmem:[%s0 + $0x190] sm:$0xff]
  %v66 = vld [vmem:[%s0 + $0x198] sm:$0xff]
  %v67 = vld [vmem:[%s0 + $0x1a0] sm:$0xff]
  %v68 = vld [vmem:[%s0 + $0x1a8] sm:$0xff]
  %v69 = vld [vmem:[%s0 + $0x1b0] sm:$0xff]
  %v70 = vld [vmem:[%s0 + $0x1b8] sm:$0xff]
  %v71 = vld [vmem:[%s0 + $0x1c0] sm:$0xff]
  %v72 = vld [vmem:[%s0 + $0x1c8] sm:$0xff]
  %v73 = vld [vmem:[%s0 + $0x1d0] sm:$0xff]
  %v74 = vld [vmem:[%s0 + $0x1d8] sm:$0xff]
  %v75 = vld [vmem:[%s0 + $0x1e0] sm:$0xff]
  %v76 = vld [vmem:[%s0 + $0x1e8] sm:$0xff]
  %v77 = vld [vmem:[%s0 + $0x1f0] sm:$0xff]
  %v78 = vld [vmem:[%s0 + $0x1f8] sm:$0xff]
  %v79 = vld [vmem:[%s0 + $0x200] sm:$0xff]
  %v80 = vld [vmem:[%s0 + $0x208] sm:$0xff]
  %v81 = vld [vmem:[%s0 + $0x210] sm:$0xff]
  %v82 = vld [vmem:[%s0 + $0x218] sm:$0xff]
  %v83 = vld [vmem:[%s0 + $0x220] sm:$0xff]
  %v84 = vld [vmem:[%s0 + $0x228] sm:$0xff]
  %v85 = vld [vmem:[%s0 + $0x230] sm:$0xff]
  %v86 = vld [vmem:[%s0 + $0x238] sm:$0xff]
  %v87 = vld [vmem:[%s0 + $0x240] sm:$0xff]
  %v88 = vld [vmem:[%s0 + $0x248] sm:$0xff]
  %v89 = vld [vmem:[%s0 + $0x250] sm:$0xff]
  %v90 = vld [vmem:[%s0 + $0x258] sm:$0xff]
  %v91 = vld [vmem:[%s0 + $0x260] sm:$0xff]
  %v92 = vld [vmem:[%s0 + $0x268] sm:$0xff]
  %v93 = vld [vmem:[%s0 + $0x270] sm:$0xff]
  %v94 = vld [vmem:[%s0 + $0x278] sm:$0xff]
  %v95 = vld [vmem:[%s0 + $0x280] sm:$0xff]
  %v96 = vld [vmem:[%s0 + $0x288] sm:$0xff]
  %v97 = vld [vmem:[%s0 + $0x290] sm:$0xff]
  %v98 = vld [vmem:[%s0 + $0x298] sm:$0xff]
  %v99 = vld [vmem:[%s0 + $0x2a0] sm:$0xff]
  %v100 = vld [vmem:[%s0 + $0x2a8] sm:$0xff]
  %v101 = vld [vmem:[%s0 + $0x2b0] sm:$0xff]
  %v102 = vld [vmem:[%s0 + $0x2b8] sm:$0xff]
  %v103 = vld [vmem:[%s0 + $0x2c0] sm:$0xff]
  %v104 = vld [vmem:[%s0 + $0x2c8] sm:$0xff]
  %v105 = vld [vmem:[%s0 + $0x2d0] sm:$0xff]
  %v106 = vld [vmem:[%s0 + $0x2d8] sm:$0xff]
  %v107 = vld [vmem:[%s0 + $0x2e0] sm:$0xff]
  %v108 = vld [vmem:[%s0 + $0x2e8] sm:$0xff]
  %v109 = vld [vmem:[%s0 + $0x2f0] sm:$0xff]
  %v110 = vld [vmem:[%s0 + $0x2f8] sm:$0xff]
  %v111 = vld [vmem:[%s0 + $0x300] sm:$0xff]
  %v112 = vld [vmem:[%s0 + $0x308] sm:$0xff]
  %v113 = vld [vmem:[%s0 + $0x310] sm:$0xff]
  %v114 = vld [vmem:[%s0 + $0x318] sm:$0xff]
  %v115 = vld [vmem:[%s0 + $0x320] sm:$0xff]
  %v116 = vld [vmem:[%s0 + $0x328] sm:$0xff]
  %v117 = vld [vmem:[%s0 + $0x330] sm:$0xff]
  %v118 = vld [vmem:[%s0 + $0x338] sm:$0xff]
  %v119 = vld [vmem:[%s0 + $0x340] sm:$0xff]
  %v120 = vld [vmem:[%s0 + $0x348] sm:$0xff]
  %v121 = vld [vmem:[%s0 + $0x350] sm:$0xff]
  %v122 = vld [vmem:[%s0 + $0x358] sm:$0xff]
  %v123 = vld [vmem:[%s0 + $0x360] sm:$0xff]
  %v124 = vld [vmem:[%s0 + $0x368] sm:$0xff]
  %v125 = vld [vmem:[%s0 + $0x370] sm:$0xff]
  %v126 = vld [vmem:[%s0 + $0x378] sm:$0xff]
  %v127 = vld [vmem:[%s0 + $0x380] sm:$0xff]
  %v128 = vld [vmem:[%s0 + $0x388] sm:$0xff]
  %v129 = vld [vmem:[%s0 + $0x390] sm:$0xff]
  %v130 = vld [vmem:[%s0 + $0x398] sm:$0xff]
  %v131 = vld [vmem:[%s0 + $0x3a0] sm:$0xff]
  %v132 = vld [vmem:[%s0 + $0x3a8] sm:$0xff]
  %v133 = vld [vmem:[%s0 + $0x3b0] sm:$0xff]
  %v134 = vld [vmem:[%s0 + $0x3b8] sm:$0xff]
  %v135 = vld [vmem:[%s0 + $0x3c0] sm:$0xff]
  %v136 = vld [vmem:[%s0 + $0x3c8] sm:$0xff]
  %v137 = vld [vmem:[%s0 + $0x3d0] sm:$0xff]
  %v138 = vld [vmem:[%s0 + $0x3d8] sm:$0xff]
  %v139 = vld [vmem:[%s0 + $0x3e0] sm:$0xff]
  %v140 = vld [vmem:[%s0 + $0x3e8] sm:$0xff]
  %v141 = vld [vmem:[%s0 + $0x3f0] sm:$0xff]
  %v142 = vld [vmem:[%s0 + $0x3f8] sm:$0xff]
  %v143 = vld [vmem:[%s0 + $0x400] sm:$0xff]
  %v144 = vld [vmem:[%s0 + $0x408] sm:$0xff]
  %v145 = vld [vmem:[%s0 + $0x410] sm:$0xff]
  %v146 = vld [vmem:[%s0 + $0x418] sm:$0xff]
  %v147 = vld [vmem:[%s0 + $0x420] sm:$0xff]
  %v148 = vld [vmem:[%s0 + $0x428] sm:$0xff]
  %v149 = vld [vmem:[%s0 + $0x430] sm:$0xff]
  %v150 = vld [vmem:[%s0 + $0x438] sm:$0xff]
  %v151 = vld [vmem:[%s0 + $0x440] sm:$0xff]
  %v152 = vld [vmem:[%s0 + $0x448] sm:$0xff]
  %v153 = vld [vmem:[%s0 + $0x450] sm:$0xff]
  %v154 = vld [vmem:[%s0 + $0x458] sm:$0xff]
  %v155 = vld [vmem:[%s0 + $0x460] sm:$0xff]
  %v156 = vld [vmem:[%s0 + $0x468] sm:$0xff]
  %v157 = vld [vmem:[%s0 + $0x470] sm:$0xff]
  %v158 = vld [vmem:[%s0 + $0x478] sm:$0xff]
  %v159 = vld [vmem:[%s0 + $0x480] sm:$0xff]
  %v160 = vld [vmem:[%s0 + $0x488] sm:$0xff]
  %v161 = vld [vmem:[%s0 + $0x490] sm:$0xff]
  %v162 = vld [vmem:[%s0 + $0x498] sm:$0xff]
  %v163 = vld [vmem:[%s0 + $0x4a0] sm:$0xff]
  %v164 = vld [vmem:[%s0 + $0x4a8] sm:$0xff]
  %v165 = vld [vmem:[%s0 + $0x4b0] sm:$0xff]
  %v166 = vld [vmem:[%s0 + $0x4b8] sm:$0xff]
  %v167 = vld [vmem:[%s0 + $0x4c0] sm:$0xff]
  %v168 = vld [vmem:[%s0 + $0x4c8] sm:$0xff]
  %v169 = vld [vmem:[%s0 + $0x4d0] sm:$0xff]
  %v170 = vld [vmem:[%s0 + $0x4d8] sm:$0xff]
  %v171 = vld [vmem:[%s0 + $0x4e0] sm:$0xff]
  %v172 = vld [vmem:[%s0 + $0x4e8] sm:$0xff]
  %v173 = vld [vmem:[%s0 + $0x4f0] sm:$0xff]
  %v174 = vld [vmem:[%s0 + $0x4f8] sm:$0xff]
  %v175 = vld [vmem:[%s0 + $0x500] sm:$0xff]
  %v176 = vld [vmem:[%s0 + $0x508] sm:$0xff]
  %v177 = vld [vmem:[%s0 + $0x510] sm:$0xff]
  %v178 = vld [vmem:[%s0 + $0x518] sm:$0xff]
  %v179 = vld [vmem:[%s0 + $0x520] sm:$0xff]
  %v180 = vld [vmem:[%s0 + $0x528] sm:$0xff]
  %v181 = vld [vmem:[%s0 + $0x530] sm:$0xff]
  %v182 = vld [vmem:[%s0 + $0x538] sm:$0xff]
  %v183 = vld [vmem:[%s0 + $0x540] sm:$0xff]
  %v184 = vld [vmem:[%s0 + $0x548] sm:$0xff]
  %v185 = vld [vmem:[%s0 + $0x550] sm:$0xff]
  %v186 = vld [vmem:[%s0 + $0x558] sm:$0xff]
  %v187 = vld [vmem:[%s0 + $0x560] sm:$0xff]
  %v188 = vld [vmem:[%s0 + $0x568] sm:$0xff]
  %v189 = vld [vmem:[%s0 + $0x570] sm:$0xff]
  %v190 = vld [vmem:[%s0 + $0x578] sm:$0xff]
  %v191 = vld [vmem:[%s0 + $0x580] sm:$0xff]
  %v192 = vld [vmem:[%s0 + $0x588] sm:$0xff]
  %v193 = vld [vmem:[%s0 + $0x590] sm:$0xff]
  %v194 = vld [vmem:[%s0 + $0x598] sm:$0xff]
  %v195 = vld [vmem:[%s0 + $0x5a0] sm:$0xff]
  %v196 = vld [vmem:[%s0 + $0x5a8] sm:$0xff]
  %v197 = vld [vmem:[%s0 + $0x5b0] sm:$0xff]
  %v198 = vld [vmem:[%s0 + $0x5b8] sm:$0xff]
  %v199 = vld [vmem:[%s0 + $0x5c0] sm:$0xff]
  %v200 = vld [vmem:[%s0 + $0x5c8] sm:$0xff]
  %v201 = vld [vmem:[%s0 + $0x5d0] sm:$0xff]
  %v202 = vld [vmem:[%s0 + $0x5d8] sm:$0xff]
  %v203 = vld [vmem:[%s0 + $0x5e0] sm:$0xff]
  %v204 = vld [vmem:[%s0 + $0x5e8] sm:$0xff]
  %v205 = vld [vmem:[%s0 + $0x5f0] sm:$0xff]
  %v206 = vld [vmem:[%s0 + $0x5f8] sm:$0xff]
  %v207 = vld [vmem:[%s0 + $0x600] sm:$0xff]
  %v208 = vld [vmem:[%s0 + $0x608] sm:$0xff]
  %v209 = vld [vmem:[%s0 + $0x610] sm:$0xff]
  %v210 = vld [vmem:[%s0 + $0x618] sm:$0xff]
  %v211 = vld [vmem:[%s0 + $0x620] sm:$0xff]
  %v212 = vld [vmem:[%s0 + $0x628] sm:$0xff]
  %v213 = vld [vmem:[%s0 + $0x630] sm:$0xff]
  %v214 = vld [vmem:[%s0 + $0x638] sm:$0xff]
  %v215 = vld [vmem:[%s0 + $0x640] sm:$0xff]
  %v216 = vld [vmem:[%s0 + $0x648] sm:$0xff]
  %v217 = vld [vmem:[%s0 + $0x650] sm:$0xff]
  %v218 = vld [vmem:[%s0 + $0x658] sm:$0xff]
  %v219 = vld [vmem:[%s0 + $0x660] sm:$0xff]
  %v220 = vld [vmem:[%s0 + $0x668] sm:$0xff]
  %v221 = vld [vmem:[%s0 + $0x670] sm:$0xff]
  %v222 = vld [vmem:[%s0 + $0x678] sm:$0xff]
  %v223 = vld [vmem:[%s0 + $0x680] sm:$0xff]
  %v224 = vld [vmem:[%s0 + $0x688] sm:$0xff]
  %v225 = vld [vmem:[%s0 + $0x690] sm:$0xff]
  %v226 = vld [vmem:[%s0 + $0x698] sm:$0xff]
  %v227 = vld [vmem:[%s0 + $0x6a0] sm:$0xff]
  %v228 = vld [vmem:[%s0 + $0x6a8] sm:$0xff]
  %v229 = vld [vmem:[%s0 + $0x6b0] sm:$0xff]
  %v230 = vld [vmem:[%s0 + $0x6b8] sm:$0xff]
  %v231 = vld [vmem:[%s0 + $0x6c0] sm:$0xff]
  %v232 = vld [vmem:[%s0 + $0x6c8] sm:$0xff]
  %v233 = vld [vmem:[%s0 + $0x6d0] sm:$0xff]
  %v234 = vld [vmem:[%s0 + $0x6d8] sm:$0xff]
  %v235 = vld [vmem:[%s0 + $0x6e0] sm:$0xff]
  %v236 = vld [vmem:[%s0 + $0x6e8] sm:$0xff]
  %v237 = vld [vmem:[%s0 + $0x6f0] sm:$0xff]
  %v238 = vld [vmem:[%s0 + $0x6f8] sm:$0xff]
  %v239 = vld [vmem:[%s0 + $0x700] sm:$0xff]
  %v240 = vld [vmem:[%s0 + $0x708] sm:$0xff]
  %v241 = vld [vmem:[%s0 + $0x710] sm:$0xff]
  %v242 = vld [vmem:[%s0 + $0x718] sm:$0xff]
  %v243 = vld [vmem:[%s0 + $0x720] sm:$0xff]
  %v244 = vld [vmem:[%s0 + $0x728] sm:$0xff]
  %v245 = vld [vmem:[%s0 + $0x730] sm:$0xff]
  %v246 = vld [vmem:[%s0 + $0x738] sm:$0xff]
  %v247 = vld [vmem:[%s0 + $0x740] sm:$0xff]
  %v248 = vld [vmem:[%s0 + $0x748] sm:$0xff]
  %v249 = vld [vmem:[%s0 + $0x750] sm:$0xff]
  %v250 = vld [vmem:[%s0 + $0x758] sm:$0xff]
  %v251 = vld [vmem:[%s0 + $0x760] sm:$0xff]
  %v252 = vld [vmem:[%s0 + $0x768] sm:$0xff]
  %v253 = vld [vmem:[%s0 + $0x770] sm:$0xff]
  %v254 = vld [vmem:[%s0 + $0x778] sm:$0xff]
  %v255 = vld [vmem:[%s0 + $0x780] sm:$0xff]
  %v256 = vld [vmem:[%s0 + $0x788] sm:$0xff]
  %v257 = vld [vmem:[%s0 + $0x790] sm:$0xff]
  %v258 = vld [vmem:[%s0 + $0x798] sm:$0xff]
  %v259 = vld [vmem:[%s0 + $0x7a0] sm:$0xff]
  %v260 = vld [vmem:[%s0 + $0x7a8] sm:$0xff]
  %v261 = vld [vmem:[%s0 + $0x7b0] sm:$0xff]
  %v262 = vld [vmem:[%s0 + $0x7b8] sm:$0xff]
  %v263 = vld [vmem:[%s0 + $0x7c0] sm:$0xff]
  %v264 = vld [vmem:[%s0 + $0x7c8] sm:$0xff]
  %v265 = vld [vmem:[%s0 + $0x7d0] sm:$0xff]
  %v266 = vld [vmem:[%s0 + $0x7d8] sm:$0xff]
  %v267 = vld [vmem:[%s0 + $0x7e0] sm:$0xff]
  %v268 = vld [vmem:[%s0 + $0x7e8] sm:$0xff]
  %v269 = vld [vmem:[%s0 + $0x7f0] sm:$0xff]
  %v270 = vld [vmem:[%s0 + $0x7f8] sm:$0xff]
  %v271 = vld [vmem:[%s0 + $0x800] sm:$0xff]
  %v272 = vld [vmem:[%s0 + $0x808] sm:$0xff]
  %v273 = vld [vmem:[%s0 + $0x810] sm:$0xff]
  %v274 = vld [vmem:[%s0 + $0x818] sm:$0xff]
  %v275 = vld [vmem:[%s0 + $0x820] sm:$0xff]
  %v276 = vld [vmem:[%s0 + $0x828] sm:$0xff]
  %v277 = vld [vmem:[%s0 + $0x830] sm:$0xff]
  %v278 = vld [vmem:[%s0 + $0x838] sm:$0xff]
  %v279 = vld [vmem:[%s0 + $0x840] sm:$0xff]
  %v280 = vld [vmem:[%s0 + $0x848] sm:$0xff]
  %v281 = vld [vmem:[%s0 + $0x850] sm:$0xff]
  %v282 = vld [vmem:[%s0 + $0x858] sm:$0xff]
  %v283 = vld [vmem:[%s0 + $0x860] sm:$0xff]
  %v284 = vld [vmem:[%s0 + $0x868] sm:$0xff]
  %v285 = vld [vmem:[%s0 + $0x870] sm:$0xff]
  %v286 = vld [vmem:[%s0 + $0x878] sm:$0xff]
  %v287 = vld [vmem:[%s0 + $0x880] sm:$0xff]
  %v288 = vld [vmem:[%s0 + $0x888] sm:$0xff]
  %v289 = vld [vmem:[%s0 + $0x890] sm:$0xff]
  %v290 = vld [vmem:[%s0 + $0x898] sm:$0xff]
  %v291 = vld [vmem:[%s0 + $0x8a0] sm:$0xff]
  %v292 = vld [vmem:[%s0 + $0x8a8] sm:$0xff]
  %v293 = vld [vmem:[%s0 + $0x8b0] sm:$0xff]
  %v294 = vld [vmem:[%s0 + $0x8b8] sm:$0xff]
  %v295 = vld [vmem:[%s0 + $0x8c0] sm:$0xff]
  %v296 = vld [vmem:[%s0 + $0x8c8] sm:$0xff]
  %v297 = vld [vmem:[%s0 + $0x8d0] sm:$0xff]
  %v298 = vld [vmem:[%s0 + $0x8d8] sm:$0xff]
  %v299 = vld [vmem:[%s0 + $0x8e0] sm:$0xff]
  %v300 = vld [vmem:[%s0 + $0x8e8] sm:$0xff]
  %v301 = vld [vmem:[%s0 + $0x8f0] sm:$0xff]
  %v302 = vld [vmem:[%s0 + $0x8f8] sm:$0xff]
  %v303 = vld [vmem:[%s0 + $0x900] sm:$0xff]
  %v304 = vld [vmem:[%s0 + $0x908] sm:$0xff]
  %v305 = vld [vmem:[%s0 + $0x910] sm:$0xff]
  %v306 = vld [vmem:[%s0 + $0x918] sm:$0xff]
  %v307 = vld [vmem:[%s0 + $0x920] sm:$0xff]
  %v308 = vld [vmem:[%s0 + $0x928] sm:$0xff]
  %v309 = vld [vmem:[%s0 + $0x930] sm:$0xff]
  %v310 = vld [vmem:[%s0 + $0x938] sm:$0xff]
  %v311 = vld [vmem:[%s0 + $0x940] sm:$0xff]
  %v312 = vld [vmem:[%s0 + $0x948] sm:$0xff]
  %v313 = vld [vmem:[%s0 + $0x950] sm:$0xff]
  %v314 = vld [vmem:[%s0 + $0x958] sm:$0xff]
  %v315 = vld [vmem:[%s0 + $0x960] sm:$0xff]
  %v316 = vld [vmem:[%s0 + $0x968] sm:$0xff]
  %v317 = vld [vmem:[%s0 + $0x970] sm:$0xff]
  %v318 = vld [vmem:[%s0 + $0x978] sm:$0xff]
  %v319 = vld [vmem:[%s0 + $0x980] sm:$0xff]
  %v320 = vld [vmem:[%s0 + $0x988] sm:$0xff]
  %v321 = vld [vmem:[%s0 + $0x990] sm:$0xff]
  %v322 = vld [vmem:[%s0 + $0x998] sm:$0xff]
  %v323 = vld [vmem:[%s0 + $0x9a0] sm:$0xff]
  %v324 = vld [vmem:[%s0 + $0x9a8] sm:$0xff]
  %v325 = vld [vmem:[%s0 + $0x9b0] sm:$0xff]
  %v326 = vld [vmem:[%s0 + $0x9b8] sm:$0xff]
  %v327 = vld [vmem:[%s0 + $0x9c0] sm:$0xff]
  %v328 = vld [vmem:[%s0 + $0x9c8] sm:$0xff]
  %v329 = vld [vmem:[%s0 + $0x9d0] sm:$0xff]
  %v330 = vld [vmem:[%s0 + $0x9d8] sm:$0xff]
  %v331 = vld [vmem:[%s0 + $0x9e0] sm:$0xff]
  %v332 = vld [vmem:[%s0 + $0x9e8] sm:$0xff]
  %v333 = vld [vmem:[%s0 + $0x9f0] sm:$0xff]
  %v334 = vld [vmem:[%s0 + $0x9f8] sm:$0xff]
  %v335 = vld [vmem:[%s0 + $0xa00] sm:$0xff]
  %v336 = vld [vmem:[%s0 + $0xa08] sm:$0xff]
  %v337 = vld [vmem:[%s0 + $0xa10] sm:$0xff]
  %v338 = vld [vmem:[%s0 + $0xa18] sm:$0xff]
  %v339 = vld [vmem:[%s0 + $0xa20] sm:$0xff]
  %v340 = vld [vmem:[%s0 + $0xa28] sm:$0xff]
  %v341 = vld [vmem:[%s0 + $0xa30] sm:$0xff]
  %v342 = vld [vmem:[%s0 + $0xa38] sm:$0xff]
  %v343 = vld [vmem:[%s0 + $0xa40] sm:$0xff]
  %v344 = vld [vmem:[%s0 + $0xa48] sm:$0xff]
  %v345 = vld [vmem:[%s0 + $0xa50] sm:$0xff]
  %v346 = vld [vmem:[%s0 + $0xa58] sm:$0xff]
  %v347 = vld [vmem:[%s0 + $0xa60] sm:$0xff]
  %v348 = vld [vmem:[%s0 + $0xa68] sm:$0xff]
  %v349 = vld [vmem:[%s0 + $0xa70] sm:$0xff]
  %v350 = vld [vmem:[%s0 + $0xa78] sm:$0xff]
  %v351 = vld [vmem:[%s0 + $0xa80] sm:$0xff]
  %v352 = vld [vmem:[%s0 + $0xa88] sm:$0xff]
  %v353 = vld [vmem:[%s0 + $0xa90] sm:$0xff]
  %v354 = vld [vmem:[%s0 + $0xa98] sm:$0xff]
  %v355 = vld [vmem:[%s0 + $0xaa0] sm:$0xff]
  %v356 = vld [vmem:[%s0 + $0xaa8] sm:$0xff]
  %v357 = vld [vmem:[%s0 + $0xab0] sm:$0xff]
  %v358 = vld [vmem:[%s0 + $0xab8] sm:$0xff]
  %v359 = vld [vmem:[%s0 + $0xac0] sm:$0xff]
  %v360 = vld [vmem:[%s0 + $0xac8] sm:$0xff]
  %v361 = vld [vmem:[%s0 + $0xad0] sm:$0xff]
  %v362 = vld [vmem:[%s0 + $0xad8] sm:$0xff]
  %v363 = vld [vmem:[%s0 + $0xae0] sm:$0xff]
  %v364 = vld [vmem:[%s0 + $0xae8] sm:$0xff]
  %v365 = vld [vmem:[%s0 + $0xaf0] sm:$0xff]
  %v366 = vld [vmem:[%s0 + $0xaf8] sm:$0xff]
  %v367 = vld [vmem:[%s0 + $0xb00] sm:$0xff]
  %v368 = vld [vmem:[%s0 + $0xb08] sm:$0xff]
  %v369 = vld [vmem:[%s0 + $0xb10] sm:$0xff]
  %v370 = vld [vmem:[%s0 + $0xb18] sm:$0xff]
  %v371 = vld [vmem:[%s0 + $0xb20] sm:$0xff]
  %v372 = vld [vmem:[%s0 + $0xb28] sm:$0xff]
  %v373 = vld [vmem:[%s0 + $0xb30] sm:$0xff]
  %v374 = vld [vmem:[%s0 + $0xb38] sm:$0xff]
  %v375 = vld [vmem:[%s0 + $0xb40] sm:$0xff]
  %v376 = vld [vmem:[%s0 + $0xb48] sm:$0xff]
  %v377 = vld [vmem:[%s0 + $0xb50] sm:$0xff]
  %v378 = vld [vmem:[%s0 + $0xb58] sm:$0xff]
  %v379 = vld [vmem:[%s0 + $0xb60] sm:$0xff]
  %v380 = vld [vmem:[%s0 + $0xb68] sm:$0xff]
  %v381 = vld [vmem:[%s0 + $0xb70] sm:$0xff]
  %v382 = vld [vmem:[%s0 + $0xb78] sm:$0xff]
  %v383 = vld [vmem:[%s0 + $0xb80] sm:$0xff]
  %v384 = vld [vmem:[%s0 + $0xb88] sm:$0xff]
  %v385 = vld [vmem:[%s0 + $0xb90] sm:$0xff]
  %v386 = vld [vmem:[%s0 + $0xb98] sm:$0xff]
  %v387 = vld [vmem:[%s0 + $0xba0] sm:$0xff]
  %v388 = vld [vmem:[%s0 + $0xba8] sm:$0xff]
  %v389 = vld [vmem:[%s0 + $0xbb0] sm:$0xff]
  %v390 = vld [vmem:[%s0 + $0xbb8] sm:$0xff]
  %v391 = vld [vmem:[%s0 + $0xbc0] sm:$0xff]
  %v392 = vld [vmem:[%s0 + $0xbc8] sm:$0xff]
  %v393 = vld [vmem:[%s0 + $0xbd0] sm:$0xff]
  %v394 = vld [vmem:[%s0 + $0xbd8] sm:$0xff]
  %v395 = vld [vmem:[%s0 + $0xbe0] sm:$0xff]
  %v396 = vld [vmem:[%s0 + $0xbe8] sm:$0xff]
  %v397 = vld [vmem:[%s0 + $0xbf0] sm:$0xff]
  %v398 = vld [vmem:[%s0 + $0xbf8] sm:$0xff]
  %v399 = vpack.c.bf16 %v16, %v15
  %v400 = vpack.c.bf16 %v18, %v17
  %v401 = vpack.c.bf16 %v20, %v19
  %v402 = vpack.c.bf16 %v22, %v21
  %v403 = vpack.c.bf16 %v24, %v23
  %v404 = vpack.c.bf16 %v26, %v25
  %v405 = vpack.c.bf16 %v28, %v27
  %v406 = vpack.c.bf16 %v30, %v29
  %v407 = vpack.c.bf16 %v32, %v31
  %v408 = vpack.c.bf16 %v34, %v33
  %v409 = vpack.c.bf16 %v36, %v35
  %v410 = vpack.c.bf16 %v38, %v37
  %v411 = vpack.c.bf16 %v40, %v39
  %v412 = vpack.c.bf16 %v42, %v41
  %v413 = vpack.c.bf16 %v44, %v43
  %v414 = vpack.c.bf16 %v46, %v45
  %v415 = vpack.c.bf16 %v48, %v47
  %v416 = vpack.c.bf16 %v50, %v49
  %v417 = vpack.c.bf16 %v52, %v51
  %v418 = vpack.c.bf16 %v54, %v53
  %v419 = vpack.c.bf16 %v56, %v55
  %v420 = vpack.c.bf16 %v58, %v57
  %v421 = vpack.c.bf16 %v60, %v59
  %v422 = vpack.c.bf16 %v62, %v61
  %v423 = vpack.c.bf16 %v64, %v63
  %v424 = vpack.c.bf16 %v66, %v65
  %v425 = vpack.c.bf16 %v68, %v67
  %v426 = vpack.c.bf16 %v70, %v69
  %v427 = vpack.c.bf16 %v72, %v71
  %v428 = vpack.c.bf16 %v74, %v73
  %v429 = vpack.c.bf16 %v76, %v75
  %v430 = vpack.c.bf16 %v78, %v77
  %v431 = vpack.c.bf16 %v80, %v79
  %v432 = vpack.c.bf16 %v82, %v81
  %v433 = vpack.c.bf16 %v84, %v83
  %v434 = vpack.c.bf16 %v86, %v85
  %v435 = vpack.c.bf16 %v88, %v87
  %v436 = vpack.c.bf16 %v90, %v89
  %v437 = vpack.c.bf16 %v92, %v91
  %v438 = vpack.c.bf16 %v94, %v93
  %v439 = vpack.c.bf16 %v96, %v95
  %v440 = vpack.c.bf16 %v98, %v97
  %v441 = vpack.c.bf16 %v100, %v99
  %v442 = vpack.c.bf16 %v102, %v101
  %v443 = vpack.c.bf16 %v104, %v103
  %v444 = vpack.c.bf16 %v106, %v105
  %v445 = vpack.c.bf16 %v108, %v107
  %v446 = vpack.c.bf16 %v110, %v109
  %v447 = vpack.c.bf16 %v112, %v111
  %v448 = vpack.c.bf16 %v114, %v113
  %v449 = vpack.c.bf16 %v116, %v115
  %v450 = vpack.c.bf16 %v118, %v117
  %v451 = vpack.c.bf16 %v120, %v119
  %v452 = vpack.c.bf16 %v122, %v121
  %v453 = vpack.c.bf16 %v124, %v123
  %v454 = vpack.c.bf16 %v126, %v125
  %v455 = vpack.c.bf16 %v128, %v127
  %v456 = vpack.c.bf16 %v130, %v129
  %v457 = vpack.c.bf16 %v132, %v131
  %v458 = vpack.c.bf16 %v134, %v133
  %v459 = vpack.c.bf16 %v136, %v135
  %v460 = vpack.c.bf16 %v138, %v137
  %v461 = vpack.c.bf16 %v140, %v139
  %v462 = vpack.c.bf16 %v142, %v141
  %v463 = vpack.c.bf16 %v144, %v143
  %v464 = vpack.c.bf16 %v146, %v145
  %v465 = vpack.c.bf16 %v148, %v147
  %v466 = vpack.c.bf16 %v150, %v149
  %v467 = vpack.c.bf16 %v152, %v151
  %v468 = vpack.c.bf16 %v154, %v153
  %v469 = vpack.c.bf16 %v156, %v155
  %v470 = vpack.c.bf16 %v158, %v157
  %v471 = vpack.c.bf16 %v160, %v159
  %v472 = vpack.c.bf16 %v162, %v161
  %v473 = vpack.c.bf16 %v164, %v163
  %v474 = vpack.c.bf16 %v166, %v165
  %v475 = vpack.c.bf16 %v168, %v167
  %v476 = vpack.c.bf16 %v170, %v169
  %v477 = vpack.c.bf16 %v172, %v171
  %v478 = vpack.c.bf16 %v174, %v173
  %v479 = vpack.c.bf16 %v176, %v175
  %v480 = vpack.c.bf16 %v178, %v177
  %v481 = vpack.c.bf16 %v180, %v179
  %v482 = vpack.c.bf16 %v182, %v181
  %v483 = vpack.c.bf16 %v184, %v183
  %v484 = vpack.c.bf16 %v186, %v185
  %v485 = vpack.c.bf16 %v188, %v187
  %v486 = vpack.c.bf16 %v190, %v189
  %v487 = vpack.c.bf16 %v192, %v191
  %v488 = vpack.c.bf16 %v194, %v193
  %v489 = vpack.c.bf16 %v196, %v195
  %v490 = vpack.c.bf16 %v198, %v197
  %v491 = vpack.c.bf16 %v200, %v199
  %v492 = vpack.c.bf16 %v202, %v201
  %v493 = vpack.c.bf16 %v204, %v203
  %v494 = vpack.c.bf16 %v206, %v205
  %v495 = vpack.c.bf16 %v208, %v207
  %v496 = vpack.c.bf16 %v210, %v209
  %v497 = vpack.c.bf16 %v212, %v211
  %v498 = vpack.c.bf16 %v214, %v213
  %v499 = vpack.c.bf16 %v216, %v215
  %v500 = vpack.c.bf16 %v218, %v217
  %v501 = vpack.c.bf16 %v220, %v219
  %v502 = vpack.c.bf16 %v222, %v221
  %v503 = vpack.c.bf16 %v224, %v223
  %v504 = vpack.c.bf16 %v226, %v225
  %v505 = vpack.c.bf16 %v228, %v227
  %v506 = vpack.c.bf16 %v230, %v229
  %v507 = vpack.c.bf16 %v232, %v231
  %v508 = vpack.c.bf16 %v234, %v233
  %v509 = vpack.c.bf16 %v236, %v235
  %v510 = vpack.c.bf16 %v238, %v237
  %v511 = vpack.c.bf16 %v240, %v239
  %v512 = vpack.c.bf16 %v242, %v241
  %v513 = vpack.c.bf16 %v244, %v243
  %v514 = vpack.c.bf16 %v246, %v245
  %v515 = vpack.c.bf16 %v248, %v247
  %v516 = vpack.c.bf16 %v250, %v249
  %v517 = vpack.c.bf16 %v252, %v251
  %v518 = vpack.c.bf16 %v254, %v253
  %v519 = vpack.c.bf16 %v256, %v255
  %v520 = vpack.c.bf16 %v258, %v257
  %v521 = vpack.c.bf16 %v260, %v259
  %v522 = vpack.c.bf16 %v262, %v261
  %v523 = vpack.c.bf16 %v264, %v263
  %v524 = vpack.c.bf16 %v266, %v265
  %v525 = vpack.c.bf16 %v268, %v267
  %v526 = vpack.c.bf16 %v270, %v269
  %v527 = vpack.c.bf16 %v272, %v271
  %v528 = vpack.c.bf16 %v274, %v273
  %v529 = vpack.c.bf16 %v276, %v275
  %v530 = vpack.c.bf16 %v278, %v277
  %v531 = vpack.c.bf16 %v280, %v279
  %v532 = vpack.c.bf16 %v282, %v281
  %v533 = vpack.c.bf16 %v284, %v283
  %v534 = vpack.c.bf16 %v286, %v285
  %v535 = vpack.c.bf16 %v288, %v287
  %v536 = vpack.c.bf16 %v290, %v289
  %v537 = vpack.c.bf16 %v292, %v291
  %v538 = vpack.c.bf16 %v294, %v293
  %v539 = vpack.c.bf16 %v296, %v295
  %v540 = vpack.c.bf16 %v298, %v297
  %v541 = vpack.c.bf16 %v300, %v299
  %v542 = vpack.c.bf16 %v302, %v301
  %v543 = vpack.c.bf16 %v304, %v303
  %v544 = vpack.c.bf16 %v306, %v305
  %v545 = vpack.c.bf16 %v308, %v307
  %v546 = vpack.c.bf16 %v310, %v309
  %v547 = vpack.c.bf16 %v312, %v311
  %v548 = vpack.c.bf16 %v314, %v313
  %v549 = vpack.c.bf16 %v316, %v315
  %v550 = vpack.c.bf16 %v318, %v317
  %v551 = vpack.c.bf16 %v320, %v319
  %v552 = vpack.c.bf16 %v322, %v321
  %v553 = vpack.c.bf16 %v324, %v323
  %v554 = vpack.c.bf16 %v326, %v325
  %v555 = vpack.c.bf16 %v328, %v327
  %v556 = vpack.c.bf16 %v330, %v329
  %v557 = vpack.c.bf16 %v332, %v331
  %v558 = vpack.c.bf16 %v334, %v333
  %v559 = vpack.c.bf16 %v336, %v335
  %v560 = vpack.c.bf16 %v338, %v337
  %v561 = vpack.c.bf16 %v340, %v339
  %v562 = vpack.c.bf16 %v342, %v341
  %v563 = vpack.c.bf16 %v344, %v343
  %v564 = vpack.c.bf16 %v346, %v345
  %v565 = vpack.c.bf16 %v348, %v347
  %v566 = vpack.c.bf16 %v350, %v349
  %v567 = vpack.c.bf16 %v352, %v351
  %v568 = vpack.c.bf16 %v354, %v353
  %v569 = vpack.c.bf16 %v356, %v355
  %v570 = vpack.c.bf16 %v358, %v357
  %v571 = vpack.c.bf16 %v360, %v359
  %v572 = vpack.c.bf16 %v362, %v361
  %v573 = vpack.c.bf16 %v364, %v363
  %v574 = vpack.c.bf16 %v366, %v365
  %v575 = vpack.c.bf16 %v368, %v367
  %v576 = vpack.c.bf16 %v370, %v369
  %v577 = vpack.c.bf16 %v372, %v371
  %v578 = vpack.c.bf16 %v374, %v373
  %v579 = vpack.c.bf16 %v376, %v375
  %v580 = vpack.c.bf16 %v378, %v377
  %v581 = vpack.c.bf16 %v380, %v379
  %v582 = vpack.c.bf16 %v382, %v381
  %v583 = vpack.c.bf16 %v384, %v383
  %v584 = vpack.c.bf16 %v386, %v385
  %v585 = vpack.c.bf16 %v388, %v387
  %v586 = vpack.c.bf16 %v390, %v389
  %v587 = vpack.c.bf16 %v392, %v391
  %v588 = vpack.c.bf16 %v394, %v393
  %v589 = vpack.c.bf16 %v396, %v395
  %v590 = vpack.c.bf16 %v398, %v397
  %v591 = vld [vmem:[%s1] sm:$0xff]
  %v592 = vld [vmem:[%s1 + $0x8] sm:$0xff]
  %v593 = vld [vmem:[%s1 + $0x10] sm:$0xff]
  %v594 = vld [vmem:[%s1 + $0x18] sm:$0xff]
  %v595 = vld [vmem:[%s1 + $0x20] sm:$0xff]
  %v596 = vld [vmem:[%s1 + $0x28] sm:$0xff]
  %v597 = vld [vmem:[%s1 + $0x30] sm:$0xff]
  %v598 = vld [vmem:[%s1 + $0x38] sm:$0xff]
  %v599 = vld [vmem:[%s1 + $0x40] sm:$0xff]
  %v600 = vld [vmem:[%s1 + $0x48] sm:$0xff]
  %v601 = vld [vmem:[%s1 + $0x50] sm:$0xff]
  %v602 = vld [vmem:[%s1 + $0x58] sm:$0xff]
  %v603 = vld [vmem:[%s1 + $0x60] sm:$0xff]
  %v604 = vld [vmem:[%s1 + $0x68] sm:$0xff]
  %v605 = vld [vmem:[%s1 + $0x70] sm:$0xff]
  %v606 = vld [vmem:[%s1 + $0x78] sm:$0xff]
  %v607 = vld [vmem:[%s1 + $0x80] sm:$0xff]
  %v608 = vld [vmem:[%s1 + $0x88] sm:$0xff]
  %v609 = vld [vmem:[%s1 + $0x90] sm:$0xff]
  %v610 = vld [vmem:[%s1 + $0x98] sm:$0xff]
  %v611 = vld [vmem:[%s1 + $0xa0] sm:$0xff]
  %v612 = vld [vmem:[%s1 + $0xa8] sm:$0xff]
  %v613 = vld [vmem:[%s1 + $0xb0] sm:$0xff]
  %v614 = vld [vmem:[%s1 + $0xb8] sm:$0xff]
  %v615 = vld [vmem:[%s1 + $0xc0] sm:$0xff]
  %v616 = vld [vmem:[%s1 + $0xc8] sm:$0xff]
  %v617 = vld [vmem:[%s1 + $0xd0] sm:$0xff]
  %v618 = vld [vmem:[%s1 + $0xd8] sm:$0xff]
  %v619 = vld [vmem:[%s1 + $0xe0] sm:$0xff]
  %v620 = vld [vmem:[%s1 + $0xe8] sm:$0xff]
  %v621 = vld [vmem:[%s1 + $0xf0] sm:$0xff]
  %v622 = vld [vmem:[%s1 + $0xf8] sm:$0xff]
  %v623 = vld [vmem:[%s1 + $0x100] sm:$0xff]
  %v624 = vld [vmem:[%s1 + $0x108] sm:$0xff]
  %v625 = vld [vmem:[%s1 + $0x110] sm:$0xff]
  %v626 = vld [vmem:[%s1 + $0x118] sm:$0xff]
  %v627 = vld [vmem:[%s1 + $0x120] sm:$0xff]
  %v628 = vld [vmem:[%s1 + $0x128] sm:$0xff]
  %v629 = vld [vmem:[%s1 + $0x130] sm:$0xff]
  %v630 = vld [vmem:[%s1 + $0x138] sm:$0xff]
  %v631 = vld [vmem:[%s1 + $0x140] sm:$0xff]
  %v632 = vld [vmem:[%s1 + $0x148] sm:$0xff]
  %v633 = vld [vmem:[%s1 + $0x150] sm:$0xff]
  %v634 = vld [vmem:[%s1 + $0x158] sm:$0xff]
  %v635 = vld [vmem:[%s1 + $0x160] sm:$0xff]
  %v636 = vld [vmem:[%s1 + $0x168] sm:$0xff]
  %v637 = vld [vmem:[%s1 + $0x170] sm:$0xff]
  %v638 = vld [vmem:[%s1 + $0x178] sm:$0xff]
  %v639 = vld [vmem:[%s1 + $0x180] sm:$0xff]
  %v640 = vld [vmem:[%s1 + $0x188] sm:$0xff]
  %v641 = vld [vmem:[%s1 + $0x190] sm:$0xff]
  %v642 = vld [vmem:[%s1 + $0x198] sm:$0xff]
  %v643 = vld [vmem:[%s1 + $0x1a0] sm:$0xff]
  %v644 = vld [vmem:[%s1 + $0x1a8] sm:$0xff]
  %v645 = vld [vmem:[%s1 + $0x1b0] sm:$0xff]
  %v646 = vld [vmem:[%s1 + $0x1b8] sm:$0xff]
  %v647 = vld [vmem:[%s1 + $0x1c0] sm:$0xff]
  %v648 = vld [vmem:[%s1 + $0x1c8] sm:$0xff]
  %v649 = vld [vmem:[%s1 + $0x1d0] sm:$0xff]
  %v650 = vld [vmem:[%s1 + $0x1d8] sm:$0xff]
  %v651 = vld [vmem:[%s1 + $0x1e0] sm:$0xff]
  %v652 = vld [vmem:[%s1 + $0x1e8] sm:$0xff]
  %v653 = vld [vmem:[%s1 + $0x1f0] sm:$0xff]
  %v654 = vld [vmem:[%s1 + $0x1f8] sm:$0xff]
  %v655 = vld [vmem:[%s1 + $0x200] sm:$0xff]
  %v656 = vld [vmem:[%s1 + $0x208] sm:$0xff]
  %v657 = vld [vmem:[%s1 + $0x210] sm:$0xff]
  %v658 = vld [vmem:[%s1 + $0x218] sm:$0xff]
  %v659 = vld [vmem:[%s1 + $0x220] sm:$0xff]
  %v660 = vld [vmem:[%s1 + $0x228] sm:$0xff]
  %v661 = vld [vmem:[%s1 + $0x230] sm:$0xff]
  %v662 = vld [vmem:[%s1 + $0x238] sm:$0xff]
  %v663 = vld [vmem:[%s1 + $0x240] sm:$0xff]
  %v664 = vld [vmem:[%s1 + $0x248] sm:$0xff]
  %v665 = vld [vmem:[%s1 + $0x250] sm:$0xff]
  %v666 = vld [vmem:[%s1 + $0x258] sm:$0xff]
  %v667 = vld [vmem:[%s1 + $0x260] sm:$0xff]
  %v668 = vld [vmem:[%s1 + $0x268] sm:$0xff]
  %v669 = vld [vmem:[%s1 + $0x270] sm:$0xff]
  %v670 = vld [vmem:[%s1 + $0x278] sm:$0xff]
  %v671 = vld [vmem:[%s1 + $0x280] sm:$0xff]
  %v672 = vld [vmem:[%s1 + $0x288] sm:$0xff]
  %v673 = vld [vmem:[%s1 + $0x290] sm:$0xff]
  %v674 = vld [vmem:[%s1 + $0x298] sm:$0xff]
  %v675 = vld [vmem:[%s1 + $0x2a0] sm:$0xff]
  %v676 = vld [vmem:[%s1 + $0x2a8] sm:$0xff]
  %v677 = vld [vmem:[%s1 + $0x2b0] sm:$0xff]
  %v678 = vld [vmem:[%s1 + $0x2b8] sm:$0xff]
  %v679 = vld [vmem:[%s1 + $0x2c0] sm:$0xff]
  %v680 = vld [vmem:[%s1 + $0x2c8] sm:$0xff]
  %v681 = vld [vmem:[%s1 + $0x2d0] sm:$0xff]
  %v682 = vld [vmem:[%s1 + $0x2d8] sm:$0xff]
  %v683 = vld [vmem:[%s1 + $0x2e0] sm:$0xff]
  %v684 = vld [vmem:[%s1 + $0x2e8] sm:$0xff]
  %v685 = vld [vmem:[%s1 + $0x2f0] sm:$0xff]
  %v686 = vld [vmem:[%s1 + $0x2f8] sm:$0xff]
  %v687 = vld [vmem:[%s1 + $0x300] sm:$0xff]
  %v688 = vld [vmem:[%s1 + $0x308] sm:$0xff]
  %v689 = vld [vmem:[%s1 + $0x310] sm:$0xff]
  %v690 = vld [vmem:[%s1 + $0x318] sm:$0xff]
  %v691 = vld [vmem:[%s1 + $0x320] sm:$0xff]
  %v692 = vld [vmem:[%s1 + $0x328] sm:$0xff]
  %v693 = vld [vmem:[%s1 + $0x330] sm:$0xff]
  %v694 = vld [vmem:[%s1 + $0x338] sm:$0xff]
  %v695 = vld [vmem:[%s1 + $0x340] sm:$0xff]
  %v696 = vld [vmem:[%s1 + $0x348] sm:$0xff]
  %v697 = vld [vmem:[%s1 + $0x350] sm:$0xff]
  %v698 = vld [vmem:[%s1 + $0x358] sm:$0xff]
  %v699 = vld [vmem:[%s1 + $0x360] sm:$0xff]
  %v700 = vld [vmem:[%s1 + $0x368] sm:$0xff]
  %v701 = vld [vmem:[%s1 + $0x370] sm:$0xff]
  %v702 = vld [vmem:[%s1 + $0x378] sm:$0xff]
  %v703 = vld [vmem:[%s1 + $0x380] sm:$0xff]
  %v704 = vld [vmem:[%s1 + $0x388] sm:$0xff]
  %v705 = vld [vmem:[%s1 + $0x390] sm:$0xff]
  %v706 = vld [vmem:[%s1 + $0x398] sm:$0xff]
  %v707 = vld [vmem:[%s1 + $0x3a0] sm:$0xff]
  %v708 = vld [vmem:[%s1 + $0x3a8] sm:$0xff]
  %v709 = vld [vmem:[%s1 + $0x3b0] sm:$0xff]
  %v710 = vld [vmem:[%s1 + $0x3b8] sm:$0xff]
  %v711 = vld [vmem:[%s1 + $0x3c0] sm:$0xff]
  %v712 = vld [vmem:[%s1 + $0x3c8] sm:$0xff]
  %v713 = vld [vmem:[%s1 + $0x3d0] sm:$0xff]
  %v714 = vld [vmem:[%s1 + $0x3d8] sm:$0xff]
  %v715 = vld [vmem:[%s1 + $0x3e0] sm:$0xff]
  %v716 = vld [vmem:[%s1 + $0x3e8] sm:$0xff]
  %v717 = vld [vmem:[%s1 + $0x3f0] sm:$0xff]
  %v718 = vld [vmem:[%s1 + $0x3f8] sm:$0xff]
  %v719 = vld [vmem:[%s1 + $0x400] sm:$0xff]
  %v720 = vld [vmem:[%s1 + $0x408] sm:$0xff]
  %v721 = vld [vmem:[%s1 + $0x410] sm:$0xff]
  %v722 = vld [vmem:[%s1 + $0x418] sm:$0xff]
  %v723 = vld [vmem:[%s1 + $0x420] sm:$0xff]
  %v724 = vld [vmem:[%s1 + $0x428] sm:$0xff]
  %v725 = vld [vmem:[%s1 + $0x430] sm:$0xff]
  %v726 = vld [vmem:[%s1 + $0x438] sm:$0xff]
  %v727 = vld [vmem:[%s1 + $0x440] sm:$0xff]
  %v728 = vld [vmem:[%s1 + $0x448] sm:$0xff]
  %v729 = vld [vmem:[%s1 + $0x450] sm:$0xff]
  %v730 = vld [vmem:[%s1 + $0x458] sm:$0xff]
  %v731 = vld [vmem:[%s1 + $0x460] sm:$0xff]
  %v732 = vld [vmem:[%s1 + $0x468] sm:$0xff]
  %v733 = vld [vmem:[%s1 + $0x470] sm:$0xff]
  %v734 = vld [vmem:[%s1 + $0x478] sm:$0xff]
  %v735 = vld [vmem:[%s1 + $0x480] sm:$0xff]
  %v736 = vld [vmem:[%s1 + $0x488] sm:$0xff]
  %v737 = vld [vmem:[%s1 + $0x490] sm:$0xff]
  %v738 = vld [vmem:[%s1 + $0x498] sm:$0xff]
  %v739 = vld [vmem:[%s1 + $0x4a0] sm:$0xff]
  %v740 = vld [vmem:[%s1 + $0x4a8] sm:$0xff]
  %v741 = vld [vmem:[%s1 + $0x4b0] sm:$0xff]
  %v742 = vld [vmem:[%s1 + $0x4b8] sm:$0xff]
  %v743 = vld [vmem:[%s1 + $0x4c0] sm:$0xff]
  %v744 = vld [vmem:[%s1 + $0x4c8] sm:$0xff]
  %v745 = vld [vmem:[%s1 + $0x4d0] sm:$0xff]
  %v746 = vld [vmem:[%s1 + $0x4d8] sm:$0xff]
  %v747 = vld [vmem:[%s1 + $0x4e0] sm:$0xff]
  %v748 = vld [vmem:[%s1 + $0x4e8] sm:$0xff]
  %v749 = vld [vmem:[%s1 + $0x4f0] sm:$0xff]
  %v750 = vld [vmem:[%s1 + $0x4f8] sm:$0xff]
  %v751 = vld [vmem:[%s1 + $0x500] sm:$0xff]
  %v752 = vld [vmem:[%s1 + $0x508] sm:$0xff]
  %v753 = vld [vmem:[%s1 + $0x510] sm:$0xff]
  %v754 = vld [vmem:[%s1 + $0x518] sm:$0xff]
  %v755 = vld [vmem:[%s1 + $0x520] sm:$0xff]
  %v756 = vld [vmem:[%s1 + $0x528] sm:$0xff]
  %v757 = vld [vmem:[%s1 + $0x530] sm:$0xff]
  %v758 = vld [vmem:[%s1 + $0x538] sm:$0xff]
  %v759 = vld [vmem:[%s1 + $0x540] sm:$0xff]
  %v760 = vld [vmem:[%s1 + $0x548] sm:$0xff]
  %v761 = vld [vmem:[%s1 + $0x550] sm:$0xff]
  %v762 = vld [vmem:[%s1 + $0x558] sm:$0xff]
  %v763 = vld [vmem:[%s1 + $0x560] sm:$0xff]
  %v764 = vld [vmem:[%s1 + $0x568] sm:$0xff]
  %v765 = vld [vmem:[%s1 + $0x570] sm:$0xff]
  %v766 = vld [vmem:[%s1 + $0x578] sm:$0xff]
  %v767 = vld [vmem:[%s1 + $0x580] sm:$0xff]
  %v768 = vld [vmem:[%s1 + $0x588] sm:$0xff]
  %v769 = vld [vmem:[%s1 + $0x590] sm:$0xff]
  %v770 = vld [vmem:[%s1 + $0x598] sm:$0xff]
  %v771 = vld [vmem:[%s1 + $0x5a0] sm:$0xff]
  %v772 = vld [vmem:[%s1 + $0x5a8] sm:$0xff]
  %v773 = vld [vmem:[%s1 + $0x5b0] sm:$0xff]
  %v774 = vld [vmem:[%s1 + $0x5b8] sm:$0xff]
  %v775 = vld [vmem:[%s1 + $0x5c0] sm:$0xff]
  %v776 = vld [vmem:[%s1 + $0x5c8] sm:$0xff]
  %v777 = vld [vmem:[%s1 + $0x5d0] sm:$0xff]
  %v778 = vld [vmem:[%s1 + $0x5d8] sm:$0xff]
  %v779 = vld [vmem:[%s1 + $0x5e0] sm:$0xff]
  %v780 = vld [vmem:[%s1 + $0x5e8] sm:$0xff]
  %v781 = vld [vmem:[%s1 + $0x5f0] sm:$0xff]
  %v782 = vld [vmem:[%s1 + $0x5f8] sm:$0xff]
  %v975 = vunpack.c.l.b16 %v591
  %v976 = vunpack.c.h.b16 %v591
  %v977 = vunpack.c.l.b16 %v592
  %v978 = vunpack.c.h.b16 %v592
  %v979 = vunpack.c.l.b16 %v593
  %v980 = vunpack.c.h.b16 %v593
  %v981 = vunpack.c.l.b16 %v594
  %v982 = vunpack.c.h.b16 %v594
  %v983 = vunpack.c.l.b16 %v595
  %v984 = vunpack.c.h.b16 %v595
  %v985 = vunpack.c.l.b16 %v596
  %v986 = vunpack.c.h.b16 %v596
  %v987 = vunpack.c.l.b16 %v597
  %v988 = vunpack.c.h.b16 %v597
  %v989 = vunpack.c.l.b16 %v598
  %v990 = vunpack.c.h.b16 %v598
  %v991 = vunpack.c.l.b16 %v599
  %v992 = vunpack.c.h.b16 %v599
  %v993 = vunpack.c.l.b16 %v600
  %v994 = vunpack.c.h.b16 %v600
  %v995 = vunpack.c.l.b16 %v601
  %v996 = vunpack.c.h.b16 %v601
  %v997 = vunpack.c.l.b16 %v602
  %v998 = vunpack.c.h.b16 %v602
  %v999 = vunpack.c.l.b16 %v603
  %v1000 = vunpack.c.h.b16 %v603
  %v1001 = vunpack.c.l.b16 %v604
  %v1002 = vunpack.c.h.b16 %v604
  %v1003 = vunpack.c.l.b16 %v605
  %v1004 = vunpack.c.h.b16 %v605
  %v1005 = vunpack.c.l.b16 %v606
  %v1006 = vunpack.c.h.b16 %v606
  %v1007 = vunpack.c.l.b16 %v607
  %v1008 = vunpack.c.h.b16 %v607
  %v1009 = vunpack.c.l.b16 %v608
  %v1010 = vunpack.c.h.b16 %v608
  %v1011 = vunpack.c.l.b16 %v609
  %v1012 = vunpack.c.h.b16 %v609
  %v1013 = vunpack.c.l.b16 %v610
  %v1014 = vunpack.c.h.b16 %v610
  %v1015 = vunpack.c.l.b16 %v611
  %v1016 = vunpack.c.h.b16 %v611
  %v1017 = vunpack.c.l.b16 %v612
  %v1018 = vunpack.c.h.b16 %v612
  %v1019 = vunpack.c.l.b16 %v613
  %v1020 = vunpack.c.h.b16 %v613
  %v1021 = vunpack.c.l.b16 %v614
  %v1022 = vunpack.c.h.b16 %v614
  %v1023 = vunpack.c.l.b16 %v615
  %v1024 = vunpack.c.h.b16 %v615
  %v1025 = vunpack.c.l.b16 %v616
  %v1026 = vunpack.c.h.b16 %v616
  %v1027 = vunpack.c.l.b16 %v617
  %v1028 = vunpack.c.h.b16 %v617
  %v1029 = vunpack.c.l.b16 %v618
  %v1030 = vunpack.c.h.b16 %v618
  %v1031 = vunpack.c.l.b16 %v619
  %v1032 = vunpack.c.h.b16 %v619
  %v1033 = vunpack.c.l.b16 %v620
  %v1034 = vunpack.c.h.b16 %v620
  %v1035 = vunpack.c.l.b16 %v621
  %v1036 = vunpack.c.h.b16 %v621
  %v1037 = vunpack.c.l.b16 %v622
  %v1038 = vunpack.c.h.b16 %v622
  %v1039 = vunpack.c.l.b16 %v623
  %v1040 = vunpack.c.h.b16 %v623
  %v1041 = vunpack.c.l.b16 %v624
  %v1042 = vunpack.c.h.b16 %v624
  %v1043 = vunpack.c.l.b16 %v625
  %v1044 = vunpack.c.h.b16 %v625
  %v1045 = vunpack.c.l.b16 %v626
  %v1046 = vunpack.c.h.b16 %v626
  %v1047 = vunpack.c.l.b16 %v627
  %v1048 = vunpack.c.h.b16 %v627
  %v1049 = vunpack.c.l.b16 %v628
  %v1050 = vunpack.c.h.b16 %v628
  %v1051 = vunpack.c.l.b16 %v629
  %v1052 = vunpack.c.h.b16 %v629
  %v1053 = vunpack.c.l.b16 %v630
  %v1054 = vunpack.c.h.b16 %v630
  %v1055 = vunpack.c.l.b16 %v631
  %v1056 = vunpack.c.h.b16 %v631
  %v1057 = vunpack.c.l.b16 %v632
  %v1058 = vunpack.c.h.b16 %v632
  %v1059 = vunpack.c.l.b16 %v633
  %v1060 = vunpack.c.h.b16 %v633
  %v1061 = vunpack.c.l.b16 %v634
  %v1062 = vunpack.c.h.b16 %v634
  %v1063 = vunpack.c.l.b16 %v635
  %v1064 = vunpack.c.h.b16 %v635
  %v1065 = vunpack.c.l.b16 %v636
  %v1066 = vunpack.c.h.b16 %v636
  %v1067 = vunpack.c.l.b16 %v637
  %v1068 = vunpack.c.h.b16 %v637
  %v1069 = vunpack.c.l.b16 %v638
  %v1070 = vunpack.c.h.b16 %v638
  %v1071 = vunpack.c.l.b16 %v639
  %v1072 = vunpack.c.h.b16 %v639
  %v1073 = vunpack.c.l.b16 %v640
  %v1074 = vunpack.c.h.b16 %v640
  %v1075 = vunpack.c.l.b16 %v641
  %v1076 = vunpack.c.h.b16 %v641
  %v1077 = vunpack.c.l.b16 %v642
  %v1078 = vunpack.c.h.b16 %v642
  %v1079 = vunpack.c.l.b16 %v643
  %v1080 = vunpack.c.h.b16 %v643
  %v1081 = vunpack.c.l.b16 %v644
  %v1082 = vunpack.c.h.b16 %v644
  %v1083 = vunpack.c.l.b16 %v645
  %v1084 = vunpack.c.h.b16 %v645
  %v1085 = vunpack.c.l.b16 %v646
  %v1086 = vunpack.c.h.b16 %v646
  %v1087 = vunpack.c.l.b16 %v647
  %v1088 = vunpack.c.h.b16 %v647
  %v1089 = vunpack.c.l.b16 %v648
  %v1090 = vunpack.c.h.b16 %v648
  %v1091 = vunpack.c.l.b16 %v649
  %v1092 = vunpack.c.h.b16 %v649
  %v1093 = vunpack.c.l.b16 %v650
  %v1094 = vunpack.c.h.b16 %v650
  %v1095 = vunpack.c.l.b16 %v651
  %v1096 = vunpack.c.h.b16 %v651
  %v1097 = vunpack.c.l.b16 %v652
  %v1098 = vunpack.c.h.b16 %v652
  %v1099 = vunpack.c.l.b16 %v653
  %v1100 = vunpack.c.h.b16 %v653
  %v1101 = vunpack.c.l.b16 %v654
  %v1102 = vunpack.c.h.b16 %v654
  %v1103 = vunpack.c.l.b16 %v655
  %v1104 = vunpack.c.h.b16 %v655
  %v1105 = vunpack.c.l.b16 %v656
  %v1106 = vunpack.c.h.b16 %v656
  %v1107 = vunpack.c.l.b16 %v657
  %v1108 = vunpack.c.h.b16 %v657
  %v1109 = vunpack.c.l.b16 %v658
  %v1110 = vunpack.c.h.b16 %v658
  %v1111 = vunpack.c.l.b16 %v659
  %v1112 = vunpack.c.h.b16 %v659
  %v1113 = vunpack.c.l.b16 %v660
  %v1114 = vunpack.c.h.b16 %v660
  %v1115 = vunpack.c.l.b16 %v661
  %v1116 = vunpack.c.h.b16 %v661
  %v1117 = vunpack.c.l.b16 %v662
  %v1118 = vunpack.c.h.b16 %v662
  %v1119 = vunpack.c.l.b16 %v663
  %v1120 = vunpack.c.h.b16 %v663
  %v1121 = vunpack.c.l.b16 %v664
  %v1122 = vunpack.c.h.b16 %v664
  %v1123 = vunpack.c.l.b16 %v665
  %v1124 = vunpack.c.h.b16 %v665
  %v1125 = vunpack.c.l.b16 %v666
  %v1126 = vunpack.c.h.b16 %v666
  %v1127 = vunpack.c.l.b16 %v667
  %v1128 = vunpack.c.h.b16 %v667
  %v1129 = vunpack.c.l.b16 %v668
  %v1130 = vunpack.c.h.b16 %v668
  %v1131 = vunpack.c.l.b16 %v669
  %v1132 = vunpack.c.h.b16 %v669
  %v1133 = vunpack.c.l.b16 %v670
  %v1134 = vunpack.c.h.b16 %v670
  %v1135 = vunpack.c.l.b16 %v671
  %v1136 = vunpack.c.h.b16 %v671
  %v1137 = vunpack.c.l.b16 %v672
  %v1138 = vunpack.c.h.b16 %v672
  %v1139 = vunpack.c.l.b16 %v673
  %v1140 = vunpack.c.h.b16 %v673
  %v1141 = vunpack.c.l.b16 %v674
  %v1142 = vunpack.c.h.b16 %v674
  %v1143 = vunpack.c.l.b16 %v675
  %v1144 = vunpack.c.h.b16 %v675
  %v1145 = vunpack.c.l.b16 %v676
  %v1146 = vunpack.c.h.b16 %v676
  %v1147 = vunpack.c.l.b16 %v677
  %v1148 = vunpack.c.h.b16 %v677
  %v1149 = vunpack.c.l.b16 %v678
  %v1150 = vunpack.c.h.b16 %v678
  %v1151 = vunpack.c.l.b16 %v679
  %v1152 = vunpack.c.h.b16 %v679
  %v1153 = vunpack.c.l.b16 %v680
  %v1154 = vunpack.c.h.b16 %v680
  %v1155 = vunpack.c.l.b16 %v681
  %v1156 = vunpack.c.h.b16 %v681
  %v1157 = vunpack.c.l.b16 %v682
  %v1158 = vunpack.c.h.b16 %v682
  %v1159 = vunpack.c.l.b16 %v683
  %v1160 = vunpack.c.h.b16 %v683
  %v1161 = vunpack.c.l.b16 %v684
  %v1162 = vunpack.c.h.b16 %v684
  %v1163 = vunpack.c.l.b16 %v685
  %v1164 = vunpack.c.h.b16 %v685
  %v1165 = vunpack.c.l.b16 %v686
  %v1166 = vunpack.c.h.b16 %v686
  %v1167 = vunpack.c.l.b16 %v687
  %v1168 = vunpack.c.h.b16 %v687
  %v1169 = vunpack.c.l.b16 %v688
  %v1170 = vunpack.c.h.b16 %v688
  %v1171 = vunpack.c.l.b16 %v689
  %v1172 = vunpack.c.h.b16 %v689
  %v1173 = vunpack.c.l.b16 %v690
  %v1174 = vunpack.c.h.b16 %v690
  %v1175 = vunpack.c.l.b16 %v691
  %v1176 = vunpack.c.h.b16 %v691
  %v1177 = vunpack.c.l.b16 %v692
  %v1178 = vunpack.c.h.b16 %v692
  %v1179 = vunpack.c.l.b16 %v693
  %v1180 = vunpack.c.h.b16 %v693
  %v1181 = vunpack.c.l.b16 %v694
  %v1182 = vunpack.c.h.b16 %v694
  %v1183 = vunpack.c.l.b16 %v695
  %v1184 = vunpack.c.h.b16 %v695
  %v1185 = vunpack.c.l.b16 %v696
  %v1186 = vunpack.c.h.b16 %v696
  %v1187 = vunpack.c.l.b16 %v697
  %v1188 = vunpack.c.h.b16 %v697
  %v1189 = vunpack.c.l.b16 %v698
  %v1190 = vunpack.c.h.b16 %v698
  %v1191 = vunpack.c.l.b16 %v699
  %v1192 = vunpack.c.h.b16 %v699
  %v1193 = vunpack.c.l.b16 %v700
  %v1194 = vunpack.c.h.b16 %v700
  %v1195 = vunpack.c.l.b16 %v701
  %v1196 = vunpack.c.h.b16 %v701
  %v1197 = vunpack.c.l.b16 %v702
  %v1198 = vunpack.c.h.b16 %v702
  %v1199 = vunpack.c.l.b16 %v703
  %v1200 = vunpack.c.h.b16 %v703
  %v1201 = vunpack.c.l.b16 %v704
  %v1202 = vunpack.c.h.b16 %v704
  %v1203 = vunpack.c.l.b16 %v705
  %v1204 = vunpack.c.h.b16 %v705
  %v1205 = vunpack.c.l.b16 %v706
  %v1206 = vunpack.c.h.b16 %v706
  %v1207 = vunpack.c.l.b16 %v707
  %v1208 = vunpack.c.h.b16 %v707
  %v1209 = vunpack.c.l.b16 %v708
  %v1210 = vunpack.c.h.b16 %v708
  %v1211 = vunpack.c.l.b16 %v709
  %v1212 = vunpack.c.h.b16 %v709
  %v1213 = vunpack.c.l.b16 %v710
  %v1214 = vunpack.c.h.b16 %v710
  %v1215 = vunpack.c.l.b16 %v711
  %v1216 = vunpack.c.h.b16 %v711
  %v1217 = vunpack.c.l.b16 %v712
  %v1218 = vunpack.c.h.b16 %v712
  %v1219 = vunpack.c.l.b16 %v713
  %v1220 = vunpack.c.h.b16 %v713
  %v1221 = vunpack.c.l.b16 %v714
  %v1222 = vunpack.c.h.b16 %v714
  %v1223 = vunpack.c.l.b16 %v715
  %v1224 = vunpack.c.h.b16 %v715
  %v1225 = vunpack.c.l.b16 %v716
  %v1226 = vunpack.c.h.b16 %v716
  %v1227 = vunpack.c.l.b16 %v717
  %v1228 = vunpack.c.h.b16 %v717
  %v1229 = vunpack.c.l.b16 %v718
  %v1230 = vunpack.c.h.b16 %v718
  %v1231 = vunpack.c.l.b16 %v719
  %v1232 = vunpack.c.h.b16 %v719
  %v1233 = vunpack.c.l.b16 %v720
  %v1234 = vunpack.c.h.b16 %v720
  %v1235 = vunpack.c.l.b16 %v721
  %v1236 = vunpack.c.h.b16 %v721
  %v1237 = vunpack.c.l.b16 %v722
  %v1238 = vunpack.c.h.b16 %v722
  %v1239 = vunpack.c.l.b16 %v723
  %v1240 = vunpack.c.h.b16 %v723
  %v1241 = vunpack.c.l.b16 %v724
  %v1242 = vunpack.c.h.b16 %v724
  %v1243 = vunpack.c.l.b16 %v725
  %v1244 = vunpack.c.h.b16 %v725
  %v1245 = vunpack.c.l.b16 %v726
  %v1246 = vunpack.c.h.b16 %v726
  %v1247 = vunpack.c.l.b16 %v727
  %v1248 = vunpack.c.h.b16 %v727
  %v1249 = vunpack.c.l.b16 %v728
  %v1250 = vunpack.c.h.b16 %v728
  %v1251 = vunpack.c.l.b16 %v729
  %v1252 = vunpack.c.h.b16 %v729
  %v1253 = vunpack.c.l.b16 %v730
  %v1254 = vunpack.c.h.b16 %v730
  %v1255 = vunpack.c.l.b16 %v731
  %v1256 = vunpack.c.h.b16 %v731
  %v1257 = vunpack.c.l.b16 %v732
  %v1258 = vunpack.c.h.b16 %v732
  %v1259 = vunpack.c.l.b16 %v733
  %v1260 = vunpack.c.h.b16 %v733
  %v1261 = vunpack.c.l.b16 %v734
  %v1262 = vunpack.c.h.b16 %v734
  %v1263 = vunpack.c.l.b16 %v735
  %v1264 = vunpack.c.h.b16 %v735
  %v1265 = vunpack.c.l.b16 %v736
  %v1266 = vunpack.c.h.b16 %v736
  %v1267 = vunpack.c.l.b16 %v737
  %v1268 = vunpack.c.h.b16 %v737
  %v1269 = vunpack.c.l.b16 %v738
  %v1270 = vunpack.c.h.b16 %v738
  %v1271 = vunpack.c.l.b16 %v739
  %v1272 = vunpack.c.h.b16 %v739
  %v1273 = vunpack.c.l.b16 %v740
  %v1274 = vunpack.c.h.b16 %v740
  %v1275 = vunpack.c.l.b16 %v741
  %v1276 = vunpack.c.h.b16 %v741
  %v1277 = vunpack.c.l.b16 %v742
  %v1278 = vunpack.c.h.b16 %v742
  %v1279 = vunpack.c.l.b16 %v743
  %v1280 = vunpack.c.h.b16 %v743
  %v1281 = vunpack.c.l.b16 %v744
  %v1282 = vunpack.c.h.b16 %v744
  %v1283 = vunpack.c.l.b16 %v745
  %v1284 = vunpack.c.h.b16 %v745
  %v1285 = vunpack.c.l.b16 %v746
  %v1286 = vunpack.c.h.b16 %v746
  %v1287 = vunpack.c.l.b16 %v747
  %v1288 = vunpack.c.h.b16 %v747
  %v1289 = vunpack.c.l.b16 %v748
  %v1290 = vunpack.c.h.b16 %v748
  %v1291 = vunpack.c.l.b16 %v749
  %v1292 = vunpack.c.h.b16 %v749
  %v1293 = vunpack.c.l.b16 %v750
  %v1294 = vunpack.c.h.b16 %v750
  %v1295 = vunpack.c.l.b16 %v751
  %v1296 = vunpack.c.h.b16 %v751
  %v1297 = vunpack.c.l.b16 %v752
  %v1298 = vunpack.c.h.b16 %v752
  %v1299 = vunpack.c.l.b16 %v753
  %v1300 = vunpack.c.h.b16 %v753
  %v1301 = vunpack.c.l.b16 %v754
  %v1302 = vunpack.c.h.b16 %v754
  %v1303 = vunpack.c.l.b16 %v755
  %v1304 = vunpack.c.h.b16 %v755
  %v1305 = vunpack.c.l.b16 %v756
  %v1306 = vunpack.c.h.b16 %v756
  %v1307 = vunpack.c.l.b16 %v757
  %v1308 = vunpack.c.h.b16 %v757
  %v1309 = vunpack.c.l.b16 %v758
  %v1310 = vunpack.c.h.b16 %v758
  %v1311 = vunpack.c.l.b16 %v759
  %v1312 = vunpack.c.h.b16 %v759
  %v1313 = vunpack.c.l.b16 %v760
  %v1314 = vunpack.c.h.b16 %v760
  %v1315 = vunpack.c.l.b16 %v761
  %v1316 = vunpack.c.h.b16 %v761
  %v1317 = vunpack.c.l.b16 %v762
  %v1318 = vunpack.c.h.b16 %v762
  %v1319 = vunpack.c.l.b16 %v763
  %v1320 = vunpack.c.h.b16 %v763
  %v1321 = vunpack.c.l.b16 %v764
  %v1322 = vunpack.c.h.b16 %v764
  %v1323 = vunpack.c.l.b16 %v765
  %v1324 = vunpack.c.h.b16 %v765
  %v1325 = vunpack.c.l.b16 %v766
  %v1326 = vunpack.c.h.b16 %v766
  %v1327 = vunpack.c.l.b16 %v767
  %v1328 = vunpack.c.h.b16 %v767
  %v1329 = vunpack.c.l.b16 %v768
  %v1330 = vunpack.c.h.b16 %v768
  %v1331 = vunpack.c.l.b16 %v769
  %v1332 = vunpack.c.h.b16 %v769
  %v1333 = vunpack.c.l.b16 %v770
  %v1334 = vunpack.c.h.b16 %v770
  %v1335 = vunpack.c.l.b16 %v771
  %v1336 = vunpack.c.h.b16 %v771
  %v1337 = vunpack.c.l.b16 %v772
  %v1338 = vunpack.c.h.b16 %v772
  %v1339 = vunpack.c.l.b16 %v773
  %v1340 = vunpack.c.h.b16 %v773
  %v1341 = vunpack.c.l.b16 %v774
  %v1342 = vunpack.c.h.b16 %v774
  %v1343 = vunpack.c.l.b16 %v775
  %v1344 = vunpack.c.h.b16 %v775
  %v1345 = vunpack.c.l.b16 %v776
  %v1346 = vunpack.c.h.b16 %v776
  %v1347 = vunpack.c.l.b16 %v777
  %v1348 = vunpack.c.h.b16 %v777
  %v1349 = vunpack.c.l.b16 %v778
  %v1350 = vunpack.c.h.b16 %v778
  %v1351 = vunpack.c.l.b16 %v779
  %v1352 = vunpack.c.h.b16 %v779
  %v1353 = vunpack.c.l.b16 %v780
  %v1354 = vunpack.c.h.b16 %v780
  %v1355 = vunpack.c.l.b16 %v781
  %v1356 = vunpack.c.h.b16 %v781
  %v1357 = vunpack.c.l.b16 %v782
  %v1358 = vunpack.c.h.b16 %v782
  %v1359 = vpack.c.b16 %v999, %v975
  %v1360 = vpack.c.b16 %v1000, %v976
  %v1361 = vpack.c.b16 %v1001, %v977
  %v1362 = vpack.c.b16 %v1002, %v978
  %v1363 = vpack.c.b16 %v1003, %v979
  %v1364 = vpack.c.b16 %v1004, %v980
  %v1365 = vpack.c.b16 %v1005, %v981
  %v1366 = vpack.c.b16 %v1006, %v982
  %v1367 = vpack.c.b16 %v1007, %v983
  %v1368 = vpack.c.b16 %v1008, %v984
  %v1369 = vpack.c.b16 %v1009, %v985
  %v1370 = vpack.c.b16 %v1010, %v986
  %v1371 = vpack.c.b16 %v1011, %v987
  %v1372 = vpack.c.b16 %v1012, %v988
  %v1373 = vpack.c.b16 %v1013, %v989
  %v1374 = vpack.c.b16 %v1014, %v990
  %v1375 = vpack.c.b16 %v1015, %v991
  %v1376 = vpack.c.b16 %v1016, %v992
  %v1377 = vpack.c.b16 %v1017, %v993
  %v1378 = vpack.c.b16 %v1018, %v994
  %v1379 = vpack.c.b16 %v1019, %v995
  %v1380 = vpack.c.b16 %v1020, %v996
  %v1381 = vpack.c.b16 %v1021, %v997
  %v1382 = vpack.c.b16 %v1022, %v998
  %v1383 = vpack.c.b16 %v1047, %v1023
  %v1384 = vpack.c.b16 %v1048, %v1024
  %v1385 = vpack.c.b16 %v1049, %v1025
  %v1386 = vpack.c.b16 %v1050, %v1026
  %v1387 = vpack.c.b16 %v1051, %v1027
  %v1388 = vpack.c.b16 %v1052, %v1028
  %v1389 = vpack.c.b16 %v1053, %v1029
  %v1390 = vpack.c.b16 %v1054, %v1030
  %v1391 = vpack.c.b16 %v1055, %v1031
  %v1392 = vpack.c.b16 %v1056, %v1032
  %v1393 = vpack.c.b16 %v1057, %v1033
  %v1394 = vpack.c.b16 %v1058, %v1034
  %v1395 = vpack.c.b16 %v1059, %v1035
  %v1396 = vpack.c.b16 %v1060, %v1036
  %v1397 = vpack.c.b16 %v1061, %v1037
  %v1398 = vpack.c.b16 %v1062, %v1038
  %v1399 = vpack.c.b16 %v1063, %v1039
  %v1400 = vpack.c.b16 %v1064, %v1040
  %v1401 = vpack.c.b16 %v1065, %v1041
  %v1402 = vpack.c.b16 %v1066, %v1042
  %v1403 = vpack.c.b16 %v1067, %v1043
  %v1404 = vpack.c.b16 %v1068, %v1044
  %v1405 = vpack.c.b16 %v1069, %v1045
  %v1406 = vpack.c.b16 %v1070, %v1046
  %v1407 = vpack.c.b16 %v1095, %v1071
  %v1408 = vpack.c.b16 %v1096, %v1072
  %v1409 = vpack.c.b16 %v1097, %v1073
  %v1410 = vpack.c.b16 %v1098, %v1074
  %v1411 = vpack.c.b16 %v1099, %v1075
  %v1412 = vpack.c.b16 %v1100, %v1076
  %v1413 = vpack.c.b16 %v1101, %v1077
  %v1414 = vpack.c.b16 %v1102, %v1078
  %v1415 = vpack.c.b16 %v1103, %v1079
  %v1416 = vpack.c.b16 %v1104, %v1080
  %v1417 = vpack.c.b16 %v1105, %v1081
  %v1418 = vpack.c.b16 %v1106, %v1082
  %v1419 = vpack.c.b16 %v1107, %v1083
  %v1420 = vpack.c.b16 %v1108, %v1084
  %v1421 = vpack.c.b16 %v1109, %v1085
  %v1422 = vpack.c.b16 %v1110, %v1086
  %v1423 = vpack.c.b16 %v1111, %v1087
  %v1424 = vpack.c.b16 %v1112, %v1088
  %v1425 = vpack.c.b16 %v1113, %v1089
  %v1426 = vpack.c.b16 %v1114, %v1090
  %v1427 = vpack.c.b16 %v1115, %v1091
  %v1428 = vpack.c.b16 %v1116, %v1092
  %v1429 = vpack.c.b16 %v1117, %v1093
  %v1430 = vpack.c.b16 %v1118, %v1094
  %v1431 = vpack.c.b16 %v1143, %v1119
  %v1432 = vpack.c.b16 %v1144, %v1120
  %v1433 = vpack.c.b16 %v1145, %v1121
  %v1434 = vpack.c.b16 %v1146, %v1122
  %v1435 = vpack.c.b16 %v1147, %v1123
  %v1436 = vpack.c.b16 %v1148, %v1124
  %v1437 = vpack.c.b16 %v1149, %v1125
  %v1438 = vpack.c.b16 %v1150, %v1126
  %v1439 = vpack.c.b16 %v1151, %v1127
  %v1440 = vpack.c.b16 %v1152, %v1128
  %v1441 = vpack.c.b16 %v1153, %v1129
  %v1442 = vpack.c.b16 %v1154, %v1130
  %v1443 = vpack.c.b16 %v1155, %v1131
  %v1444 = vpack.c.b16 %v1156, %v1132
  %v1445 = vpack.c.b16 %v1157, %v1133
  %v1446 = vpack.c.b16 %v1158, %v1134
  %v1447 = vpack.c.b16 %v1159, %v1135
  %v1448 = vpack.c.b16 %v1160, %v1136
  %v1449 = vpack.c.b16 %v1161, %v1137
  %v1450 = vpack.c.b16 %v1162, %v1138
  %v1451 = vpack.c.b16 %v1163, %v1139
  %v1452 = vpack.c.b16 %v1164, %v1140
  %v1453 = vpack.c.b16 %v1165, %v1141
  %v1454 = vpack.c.b16 %v1166, %v1142
  %v1455 = vpack.c.b16 %v1191, %v1167
  %v1456 = vpack.c.b16 %v1192, %v1168
  %v1457 = vpack.c.b16 %v1193, %v1169
  %v1458 = vpack.c.b16 %v1194, %v1170
  %v1459 = vpack.c.b16 %v1195, %v1171
  %v1460 = vpack.c.b16 %v1196, %v1172
  %v1461 = vpack.c.b16 %v1197, %v1173
  %v1462 = vpack.c.b16 %v1198, %v1174
  %v1463 = vpack.c.b16 %v1199, %v1175
  %v1464 = vpack.c.b16 %v1200, %v1176
  %v1465 = vpack.c.b16 %v1201, %v1177
  %v1466 = vpack.c.b16 %v1202, %v1178
  %v1467 = vpack.c.b16 %v1203, %v1179
  %v1468 = vpack.c.b16 %v1204, %v1180
  %v1469 = vpack.c.b16 %v1205, %v1181
  %v1470 = vpack.c.b16 %v1206, %v1182
  %v1471 = vpack.c.b16 %v1207, %v1183
  %v1472 = vpack.c.b16 %v1208, %v1184
  %v1473 = vpack.c.b16 %v1209, %v1185
  %v1474 = vpack.c.b16 %v1210, %v1186
  %v1475 = vpack.c.b16 %v1211, %v1187
  %v1476 = vpack.c.b16 %v1212, %v1188
  %v1477 = vpack.c.b16 %v1213, %v1189
  %v1478 = vpack.c.b16 %v1214, %v1190
  %v1479 = vpack.c.b16 %v1239, %v1215
  %v1480 = vpack.c.b16 %v1240, %v1216
  %v1481 = vpack.c.b16 %v1241, %v1217
  %v1482 = vpack.c.b16 %v1242, %v1218
  %v1483 = vpack.c.b16 %v1243, %v1219
  %v1484 = vpack.c.b16 %v1244, %v1220
  %v1485 = vpack.c.b16 %v1245, %v1221
  %v1486 = vpack.c.b16 %v1246, %v1222
  %v1487 = vpack.c.b16 %v1247, %v1223
  %v1488 = vpack.c.b16 %v1248, %v1224
  %v1489 = vpack.c.b16 %v1249, %v1225
  %v1490 = vpack.c.b16 %v1250, %v1226
  %v1491 = vpack.c.b16 %v1251, %v1227
  %v1492 = vpack.c.b16 %v1252, %v1228
  %v1493 = vpack.c.b16 %v1253, %v1229
  %v1494 = vpack.c.b16 %v1254, %v1230
  %v1495 = vpack.c.b16 %v1255, %v1231
  %v1496 = vpack.c.b16 %v1256, %v1232
  %v1497 = vpack.c.b16 %v1257, %v1233
  %v1498 = vpack.c.b16 %v1258, %v1234
  %v1499 = vpack.c.b16 %v1259, %v1235
  %v1500 = vpack.c.b16 %v1260, %v1236
  %v1501 = vpack.c.b16 %v1261, %v1237
  %v1502 = vpack.c.b16 %v1262, %v1238
  %v1503 = vpack.c.b16 %v1287, %v1263
  %v1504 = vpack.c.b16 %v1288, %v1264
  %v1505 = vpack.c.b16 %v1289, %v1265
  %v1506 = vpack.c.b16 %v1290, %v1266
  %v1507 = vpack.c.b16 %v1291, %v1267
  %v1508 = vpack.c.b16 %v1292, %v1268
  %v1509 = vpack.c.b16 %v1293, %v1269
  %v1510 = vpack.c.b16 %v1294, %v1270
  %v1511 = vpack.c.b16 %v1295, %v1271
  %v1512 = vpack.c.b16 %v1296, %v1272
  %v1513 = vpack.c.b16 %v1297, %v1273
  %v1514 = vpack.c.b16 %v1298, %v1274
  %v1515 = vpack.c.b16 %v1299, %v1275
  %v1516 = vpack.c.b16 %v1300, %v1276
  %v1517 = vpack.c.b16 %v1301, %v1277
  %v1518 = vpack.c.b16 %v1302, %v1278
  %v1519 = vpack.c.b16 %v1303, %v1279
  %v1520 = vpack.c.b16 %v1304, %v1280
  %v1521 = vpack.c.b16 %v1305, %v1281
  %v1522 = vpack.c.b16 %v1306, %v1282
  %v1523 = vpack.c.b16 %v1307, %v1283
  %v1524 = vpack.c.b16 %v1308, %v1284
  %v1525 = vpack.c.b16 %v1309, %v1285
  %v1526 = vpack.c.b16 %v1310, %v1286
  %v1527 = vpack.c.b16 %v1335, %v1311
  %v1528 = vpack.c.b16 %v1336, %v1312
  %v1529 = vpack.c.b16 %v1337, %v1313
  %v1530 = vpack.c.b16 %v1338, %v1314
  %v1531 = vpack.c.b16 %v1339, %v1315
  %v1532 = vpack.c.b16 %v1340, %v1316
  %v1533 = vpack.c.b16 %v1341, %v1317
  %v1534 = vpack.c.b16 %v1342, %v1318
  %v1535 = vpack.c.b16 %v1343, %v1319
  %v1536 = vpack.c.b16 %v1344, %v1320
  %v1537 = vpack.c.b16 %v1345, %v1321
  %v1538 = vpack.c.b16 %v1346, %v1322
  %v1539 = vpack.c.b16 %v1347, %v1323
  %v1540 = vpack.c.b16 %v1348, %v1324
  %v1541 = vpack.c.b16 %v1349, %v1325
  %v1542 = vpack.c.b16 %v1350, %v1326
  %v1543 = vpack.c.b16 %v1351, %v1327
  %v1544 = vpack.c.b16 %v1352, %v1328
  %v1545 = vpack.c.b16 %v1353, %v1329
  %v1546 = vpack.c.b16 %v1354, %v1330
  %v1547 = vpack.c.b16 %v1355, %v1331
  %v1548 = vpack.c.b16 %v1356, %v1332
  %v1549 = vpack.c.b16 %v1357, %v1333
  %v1550 = vpack.c.b16 %v1358, %v1334
  %1743 = vmatprep.subr.bf16.mxu0 0
  %1744 = vmatpush1.bf16.msra.mxu0 %v399
  %1745 = vmatprep.subr.bf16.mxu0 0
  %1746 = vmatpush1.bf16.msra.mxu0 %v400
  %1747 = vmatprep.subr.bf16.mxu0 0
  %1748 = vmatpush1.bf16.msra.mxu0 %v401
  %1749 = vmatprep.subr.bf16.mxu0 0
  %1750 = vmatpush1.bf16.msra.mxu0 %v402
  %1751 = vmatprep.subr.bf16.mxu0 0
  %1752 = vmatpush1.bf16.msra.mxu0 %v403
  %1753 = vmatprep.subr.bf16.mxu0 0
  %1754 = vmatpush1.bf16.msra.mxu0 %v404
  %1755 = vmatprep.subr.bf16.mxu0 0
  %1756 = vmatpush1.bf16.msra.mxu0 %v405
  %1757 = vmatprep.subr.bf16.mxu0 0
  %1758 = vmatpush1.bf16.msra.mxu0 %v406
  %1759 = vmatprep.subr.bf16.mxu0 0
  %1760 = vmatpush1.bf16.msra.mxu0 %v407
  %1761 = vmatprep.subr.bf16.mxu0 0
  %1762 = vmatpush1.bf16.msra.mxu0 %v408
  %1763 = vmatprep.subr.bf16.mxu0 0
  %1764 = vmatpush1.bf16.msra.mxu0 %v409
  %1765 = vmatprep.subr.bf16.mxu0 0
  %1766 = vmatpush1.bf16.msra.mxu0 %v410
  %1767 = vmatprep.subr.bf16.mxu0 0
  %1768 = vmatpush1.bf16.msra.mxu0 %v411
  %1769 = vmatprep.subr.bf16.mxu0 0
  %1770 = vmatpush1.bf16.msra.mxu0 %v412
  %1771 = vmatprep.subr.bf16.mxu0 0
  %1772 = vmatpush1.bf16.msra.mxu0 %v413
  %1773 = vmatprep.subr.bf16.mxu0 0
  %1774 = vmatpush1.bf16.msra.mxu0 %v414
  %1775 = vmatprep.mubr.bf16.mxu0 %v1360
  %1776 = vmatmul.mubr.bf16.gmra.mrb[0].mxu0 %v1359
  %v1777 = vpop.f32.mrb[0].mxu0
  %v1778 = vadd.f32 0.0, %v1777
  %v1779 = vpop.f32.mrb[0].mxu0
  %v1780 = vpop.f32.mrb[0].mxu0
  %v1781 = vadd.f32 0.0, %v1780
  %v1782 = vpop.f32.mrb[0].mxu0
  %1783 = vmatprep.mubr.bf16.mxu0 %v1384
  %1784 = vmatmul.mubr.bf16.gmra.mrb[0].mxu0 %v1383
  %v1785 = vpop.f32.mrb[0].mxu0
  %v1786 = vadd.f32 0.0, %v1785
  %v1787 = vpop.f32.mrb[0].mxu0
  %v1788 = vpop.f32.mrb[0].mxu0
  %v1789 = vadd.f32 0.0, %v1788
  %v1790 = vpop.f32.mrb[0].mxu0
  %1791 = vmatprep.mubr.bf16.mxu0 %v1408
  %1792 = vmatmul.mubr.bf16.gmra.mrb[0].mxu0 %v1407
  %v1793 = vpop.f32.mrb[0].mxu0
  %v1794 = vadd.f32 0.0, %v1793
  %v1795 = vpop.f32.mrb[0].mxu0
  %v1796 = vpop.f32.mrb[0].mxu0
  %v1797 = vadd.f32 0.0, %v1796
  %v1798 = vpop.f32.mrb[0].mxu0
  %1799 = vmatprep.mubr.bf16.mxu0 %v1432
  %1800 = vmatmul.mubr.bf16.gmra.mrb[0].mxu0 %v1431
  %v1801 = vpop.f32.mrb[0].mxu0
  %v1802 = vadd.f32 0.0, %v1801
  %v1803 = vpop.f32.mrb[0].mxu0
  %v1804 = vpop.f32.mrb[0].mxu0
  %v1805 = vadd.f32 0.0, %v1804
  %v1806 = vpop.f32.mrb[0].mxu0
  %1807 = vmatprep.mubr.bf16.mxu0 %v1456
  %1808 = vmatmul.mubr.bf16.gmra.mrb[0].mxu0 %v1455
  %v1809 = vpop.f32.mrb[0].mxu0
  %v1810 = vadd.f32 0.0, %v1809
  %v1811 = vpop.f32.mrb[0].mxu0
  %v1812 = vpop.f32.mrb[0].mxu0
  %v1813 = vadd.f32 0.0, %v1812
  %v1814 = vpop.f32.mrb[0].mxu0
  %1815 = vmatprep.mubr.bf16.mxu0 %v1480
  %1816 = vmatmul.mubr.bf16.gmra.mrb[0].mxu0 %v1479
  %v1817 = vpop.f32.mrb[0].mxu0
  %v1818 = vadd.f32 0.0, %v1817
  %v1819 = vpop.f32.mrb[0].mxu0
  %v1820 = vpop.f32.mrb[0].mxu0
  %v1821 = vadd.f32 0.0, %v1820
  %v1822 = vpop.f32.mrb[0].mxu0
  %1823 = vmatprep.mubr.bf16.mxu0 %v1504
  %1824 = vmatmul.mubr.bf16.gmra.mrb[0].mxu0 %v1503
  %v1825 = vpop.f32.mrb[0].mxu0
  %v1826 = vadd.f32 0.0, %v1825
  %v1827 = vpop.f32.mrb[0].mxu0
  %v1828 = vpop.f32.mrb[0].mxu0
  %v1829 = vadd.f32 0.0, %v1828
  %v1830 = vpop.f32.mrb[0].mxu0
  %1831 = vmatprep.mubr.bf16.mxu0 %v1528
  %1832 = vmatmul.mubr.bf16.gmra.mrb[0].mxu0 %v1527
  %v1833 = vpop.f32.mrb[0].mxu0
  %v1834 = vadd.f32 0.0, %v1833
  %v1835 = vpop.f32.mrb[0].mxu0
  %v1836 = vpop.f32.mrb[0].mxu0
  %v1837 = vadd.f32 0.0, %v1836
  %v1838 = vpop.f32.mrb[0].mxu0
  %1839 = vdwg.mxu0
  %1840 = vmatprep.subr.bf16.mxu0 0
  %1841 = vmatpush1.bf16.msra.mxu0 %v415
  %1842 = vmatprep.subr.bf16.mxu0 0
  %1843 = vmatpush1.bf16.msra.mxu0 %v416
  %1844 = vmatprep.subr.bf16.mxu0 0
  %1845 = vmatpush1.bf16.msra.mxu0 %v417
  %1846 = vmatprep.subr.bf16.mxu0 0
  %1847 = vmatpush1.bf16.msra.mxu0 %v418
  %1848 = vmatprep.subr.bf16.mxu0 0
  %1849 = vmatpush1.bf16.msra.mxu0 %v419
  %1850 = vmatprep.subr.bf16.mxu0 0
  %1851 = vmatpush1.bf16.msra.mxu0 %v420
  %1852 = vmatprep.subr.bf16.mxu0 0
  %1853 = vmatpush1.bf16.msra.mxu0 %v421
  %1854 = vmatprep.subr.bf16.mxu0 0
  %1855 = vmatpush1.bf16.msra.mxu0 %v422
  %1856 = vmatprep.subr.bf16.mxu0 0
  %1857 = vmatpush1.bf16.msra.mxu0 %v423
  %1858 = vmatprep.subr.bf16.mxu0 0
  %1859 = vmatpush1.bf16.msra.mxu0 %v424
  %1860 = vmatprep.subr.bf16.mxu0 0
  %1861 = vmatpush1.bf16.msra.mxu0 %v425
  %1862 = vmatprep.subr.bf16.mxu0 0
  %1863 = vmatpush1.bf16.msra.mxu0 %v426
  %1864 = vmatprep.subr.bf16.mxu0 0
  %1865 = vmatpush1.bf16.msra.mxu0 %v427
  %1866 = vmatprep.subr.bf16.mxu0 0
  %1867 = vmatpush1.bf16.msra.mxu0 %v428
  %1868 = vmatprep.subr.bf16.mxu0 0
  %1869 = vmatpush1.bf16.msra.mxu0 %v429
  %1870 = vmatprep.subr.bf16.mxu0 0
  %1871 = vmatpush1.bf16.msra.mxu0 %v430
  %1872 = vmatprep.mubr.bf16.mxu0 %v1362
  %1873 = vmatmul.mubr.bf16.gmra.mrb[0].mxu0 %v1361
  %v1874 = vpop.f32.mrb[0].mxu0
  %v1875 = vadd.f32 %v1778, %v1874
  %v1876 = vpop.f32.mrb[0].mxu0
  %v1877 = vpop.f32.mrb[0].mxu0
  %v1878 = vadd.f32 %v1781, %v1877
  %v1879 = vpop.f32.mrb[0].mxu0
  %1880 = vmatprep.mubr.bf16.mxu0 %v1386
  %1881 = vmatmul.mubr.bf16.gmra.mrb[0].mxu0 %v1385
  %v1882 = vpop.f32.mrb[0].mxu0
  %v1883 = vadd.f32 %v1786, %v1882
  %v1884 = vpop.f32.mrb[0].mxu0
  %v1885 = vpop.f32.mrb[0].mxu0
  %v1886 = vadd.f32 %v1789, %v1885
  %v1887 = vpop.f32.mrb[0].mxu0
  %1888 = vmatprep.mubr.bf16.mxu0 %v1410
  %1889 = vmatmul.mubr.bf16.gmra.mrb[0].mxu0 %v1409
  %v1890 = vpop.f32.mrb[0].mxu0
  %v1891 = vadd.f32 %v1794, %v1890
  %v1892 = vpop.f32.mrb[0].mxu0
  %v1893 = vpop.f32.mrb[0].mxu0
  %v1894 = vadd.f32 %v1797, %v1893
  %v1895 = vpop.f32.mrb[0].mxu0
  %1896 = vmatprep.mubr.bf16.mxu0 %v1434
  %1897 = vmatmul.mubr.bf16.gmra.mrb[0].mxu0 %v1433
  %v1898 = vpop.f32.mrb[0].mxu0
  %v1899 = vadd.f32 %v1802, %v1898
  %v1900 = vpop.f32.mrb[0].mxu0
  %v1901 = vpop.f32.mrb[0].mxu0
  %v1902 = vadd.f32 %v1805, %v1901
  %v1903 = vpop.f32.mrb[0].mxu0
  %1904 = vmatprep.mubr.bf16.mxu0 %v1458
  %1905 = vmatmul.mubr.bf16.gmra.mrb[0].mxu0 %v1457
  %v1906 = vpop.f32.mrb[0].mxu0
  %v1907 = vadd.f32 %v1810, %v1906
  %v1908 = vpop.f32.mrb[0].mxu0
  %v1909 = vpop.f32.mrb[0].mxu0
  %v1910 = vadd.f32 %v1813, %v1909
  %v1911 = vpop.f32.mrb[0].mxu0
  %1912 = vmatprep.mubr.bf16.mxu0 %v1482
  %1913 = vmatmul.mubr.bf16.gmra.mrb[0].mxu0 %v1481
  %v1914 = vpop.f32.mrb[0].mxu0
  %v1915 = vadd.f32 %v1818, %v1914
  %v1916 = vpop.f32.mrb[0].mxu0
  %v1917 = vpop.f32.mrb[0].mxu0
  %v1918 = vadd.f32 %v1821, %v1917
  %v1919 = vpop.f32.mrb[0].mxu0
  %1920 = vmatprep.mubr.bf16.mxu0 %v1506
  %1921 = vmatmul.mubr.bf16.gmra.mrb[0].mxu0 %v1505
  %v1922 = vpop.f32.mrb[0].mxu0
  %v1923 = vadd.f32 %v1826, %v1922
  %v1924 = vpop.f32.mrb[0].mxu0
  %v1925 = vpop.f32.mrb[0].mxu0
  %v1926 = vadd.f32 %v1829, %v1925
  %v1927 = vpop.f32.mrb[0].mxu0
  %1928 = vmatprep.mubr.bf16.mxu0 %v1530
  %1929 = vmatmul.mubr.bf16.gmra.mrb[0].mxu0 %v1529
  %v1930 = vpop.f32.mrb[0].mxu0
  %v1931 = vadd.f32 %v1834, %v1930
  %v1932 = vpop.f32.mrb[0].mxu0
  %v1933 = vpop.f32.mrb[0].mxu0
  %v1934 = vadd.f32 %v1837, %v1933
  %v1935 = vpop.f32.mrb[0].mxu0
  %1936 = vdwg.mxu0
  %1937 = vmatprep.subr.bf16.mxu0 0
  %1938 = vmatpush1.bf16.msra.mxu0 %v431
  %1939 = vmatprep.subr.bf16.mxu0 0
  %1940 = vmatpush1.bf16.msra.mxu0 %v432
  %1941 = vmatprep.subr.bf16.mxu0 0
  %1942 = vmatpush1.bf16.msra.mxu0 %v433
  %1943 = vmatprep.subr.bf16.mxu0 0
  %1944 = vmatpush1.bf16.msra.mxu0 %v434
  %1945 = vmatprep.subr.bf16.mxu0 0
  %1946 = vmatpush1.bf16.msra.mxu0 %v435
  %1947 = vmatprep.subr.bf16.mxu0 0
  %1948 = vmatpush1.bf16.msra.mxu0 %v436
  %1949 = vmatprep.subr.bf16.mxu0 0
  %1950 = vmatpush1.bf16.msra.mxu0 %v437
  %1951 = vmatprep.subr.bf16.mxu0 0
  %1952 = vmatpush1.bf16.msra.mxu0 %v438
  %1953 = vmatprep.subr.bf16.mxu0 0
  %1954 = vmatpush1.bf16.msra.mxu0 %v439
  %1955 = vmatprep.subr.bf16.mxu0 0
  %1956 = vmatpush1.bf16.msra.mxu0 %v440
  %1957 = vmatprep.subr.bf16.mxu0 0
  %1958 = vmatpush1.bf16.msra.mxu0 %v441
  %1959 = vmatprep.subr.bf16.mxu0 0
  %1960 = vmatpush1.bf16.msra.mxu0 %v442
  %1961 = vmatprep.subr.bf16.mxu0 0
  %1962 = vmatpush1.bf16.msra.mxu0 %v443
  %1963 = vmatprep.subr.bf16.mxu0 0
  %1964 = vmatpush1.bf16.msra.mxu0 %v444
  %1965 = vmatprep.subr.bf16.mxu0 0
  %1966 = vmatpush1.bf16.msra.mxu0 %v445
  %1967 = vmatprep.subr.bf16.mxu0 0
  %1968 = vmatpush1.bf16.msra.mxu0 %v446
  %1969 = vmatprep.mubr.bf16.mxu0 %v1364
  %1970 = vmatmul.mubr.bf16.gmra.mrb[0].mxu0 %v1363
  %v1971 = vpop.f32.mrb[0].mxu0
  %v1972 = vadd.f32 %v1875, %v1971
  %v1973 = vpop.f32.mrb[0].mxu0
  %v1974 = vpop.f32.mrb[0].mxu0
  %v1975 = vadd.f32 %v1878, %v1974
  %v1976 = vpop.f32.mrb[0].mxu0
  %1977 = vmatprep.mubr.bf16.mxu0 %v1388
  %1978 = vmatmul.mubr.bf16.gmra.mrb[0].mxu0 %v1387
  %v1979 = vpop.f32.mrb[0].mxu0
  %v1980 = vadd.f32 %v1883, %v1979
  %v1981 = vpop.f32.mrb[0].mxu0
  %v1982 = vpop.f32.mrb[0].mxu0
  %v1983 = vadd.f32 %v1886, %v1982
  %v1984 = vpop.f32.mrb[0].mxu0
  %1985 = vmatprep.mubr.bf16.mxu0 %v1412
  %1986 = vmatmul.mubr.bf16.gmra.mrb[0].mxu0 %v1411
  %v1987 = vpop.f32.mrb[0].mxu0
  %v1988 = vadd.f32 %v1891, %v1987
  %v1989 = vpop.f32.mrb[0].mxu0
  %v1990 = vpop.f32.mrb[0].mxu0
  %v1991 = vadd.f32 %v1894, %v1990
  %v1992 = vpop.f32.mrb[0].mxu0
  %1993 = vmatprep.mubr.bf16.mxu0 %v1436
  %1994 = vmatmul.mubr.bf16.gmra.mrb[0].mxu0 %v1435
  %v1995 = vpop.f32.mrb[0].mxu0
  %v1996 = vadd.f32 %v1899, %v1995
  %v1997 = vpop.f32.mrb[0].mxu0
  %v1998 = vpop.f32.mrb[0].mxu0
  %v1999 = vadd.f32 %v1902, %v1998
  %v2000 = vpop.f32.mrb[0].mxu0
  %2001 = vmatprep.mubr.bf16.mxu0 %v1460
  %2002 = vmatmul.mubr.bf16.gmra.mrb[0].mxu0 %v1459
  %v2003 = vpop.f32.mrb[0].mxu0
  %v2004 = vadd.f32 %v1907, %v2003
  %v2005 = vpop.f32.mrb[0].mxu0
  %v2006 = vpop.f32.mrb[0].mxu0
  %v2007 = vadd.f32 %v1910, %v2006
  %v2008 = vpop.f32.mrb[0].mxu0
  %2009 = vmatprep.mubr.bf16.mxu0 %v1484
  %2010 = vmatmul.mubr.bf16.gmra.mrb[0].mxu0 %v1483
  %v2011 = vpop.f32.mrb[0].mxu0
  %v2012 = vadd.f32 %v1915, %v2011
  %v2013 = vpop.f32.mrb[0].mxu0
  %v2014 = vpop.f32.mrb[0].mxu0
  %v2015 = vadd.f32 %v1918, %v2014
  %v2016 = vpop.f32.mrb[0].mxu0
  %2017 = vmatprep.mubr.bf16.mxu0 %v1508
  %2018 = vmatmul.mubr.bf16.gmra.mrb[0].mxu0 %v1507
  %v2019 = vpop.f32.mrb[0].mxu0
  %v2020 = vadd.f32 %v1923, %v2019
  %v2021 = vpop.f32.mrb[0].mxu0
  %v2022 = vpop.f32.mrb[0].mxu0
  %v2023 = vadd.f32 %v1926, %v2022
  %v2024 = vpop.f32.mrb[0].mxu0
  %2025 = vmatprep.mubr.bf16.mxu0 %v1532
  %2026 = vmatmul.mubr.bf16.gmra.mrb[0].mxu0 %v1531
  %v2027 = vpop.f32.mrb[0].mxu0
  %v2028 = vadd.f32 %v1931, %v2027
  %v2029 = vpop.f32.mrb[0].mxu0
  %v2030 = vpop.f32.mrb[0].mxu0
  %v2031 = vadd.f32 %v1934, %v2030
  %v2032 = vpop.f32.mrb[0].mxu0
  %2033 = vdwg.mxu0
  %2034 = vmatprep.subr.bf16.mxu0 0
  %2035 = vmatpush1.bf16.msra.mxu0 %v447
  %2036 = vmatprep.subr.bf16.mxu0 0
  %2037 = vmatpush1.bf16.msra.mxu0 %v448
  %2038 = vmatprep.subr.bf16.mxu0 0
  %2039 = vmatpush1.bf16.msra.mxu0 %v449
  %2040 = vmatprep.subr.bf16.mxu0 0
  %2041 = vmatpush1.bf16.msra.mxu0 %v450
  %2042 = vmatprep.subr.bf16.mxu0 0
  %2043 = vmatpush1.bf16.msra.mxu0 %v451
  %2044 = vmatprep.subr.bf16.mxu0 0
  %2045 = vmatpush1.bf16.msra.mxu0 %v452
  %2046 = vmatprep.subr.bf16.mxu0 0
  %2047 = vmatpush1.bf16.msra.mxu0 %v453
  %2048 = vmatprep.subr.bf16.mxu0 0
  %2049 = vmatpush1.bf16.msra.mxu0 %v454
  %2050 = vmatprep.subr.bf16.mxu0 0
  %2051 = vmatpush1.bf16.msra.mxu0 %v455
  %2052 = vmatprep.subr.bf16.mxu0 0
  %2053 = vmatpush1.bf16.msra.mxu0 %v456
  %2054 = vmatprep.subr.bf16.mxu0 0
  %2055 = vmatpush1.bf16.msra.mxu0 %v457
  %2056 = vmatprep.subr.bf16.mxu0 0
  %2057 = vmatpush1.bf16.msra.mxu0 %v458
  %2058 = vmatprep.subr.bf16.mxu0 0
  %2059 = vmatpush1.bf16.msra.mxu0 %v459
  %2060 = vmatprep.subr.bf16.mxu0 0
  %2061 = vmatpush1.bf16.msra.mxu0 %v460
  %2062 = vmatprep.subr.bf16.mxu0 0
  %2063 = vmatpush1.bf16.msra.mxu0 %v461
  %2064 = vmatprep.subr.bf16.mxu0 0
  %2065 = vmatpush1.bf16.msra.mxu0 %v462
  %2066 = vmatprep.mubr.bf16.mxu0 %v1366
  %2067 = vmatmul.mubr.bf16.gmra.mrb[0].mxu0 %v1365
  %v2068 = vpop.f32.mrb[0].mxu0
  %v2069 = vadd.f32 %v1972, %v2068
  %v2070 = vpop.f32.mrb[0].mxu0
  %v2071 = vpop.f32.mrb[0].mxu0
  %v2072 = vadd.f32 %v1975, %v2071
  %v2073 = vpop.f32.mrb[0].mxu0
  %2074 = vmatprep.mubr.bf16.mxu0 %v1390
  %2075 = vmatmul.mubr.bf16.gmra.mrb[0].mxu0 %v1389
  %v2076 = vpop.f32.mrb[0].mxu0
  %v2077 = vadd.f32 %v1980, %v2076
  %v2078 = vpop.f32.mrb[0].mxu0
  %v2079 = vpop.f32.mrb[0].mxu0
  %v2080 = vadd.f32 %v1983, %v2079
  %v2081 = vpop.f32.mrb[0].mxu0
  %2082 = vmatprep.mubr.bf16.mxu0 %v1414
  %2083 = vmatmul.mubr.bf16.gmra.mrb[0].mxu0 %v1413
  %v2084 = vpop.f32.mrb[0].mxu0
  %v2085 = vadd.f32 %v1988, %v2084
  %v2086 = vpop.f32.mrb[0].mxu0
  %v2087 = vpop.f32.mrb[0].mxu0
  %v2088 = vadd.f32 %v1991, %v2087
  %v2089 = vpop.f32.mrb[0].mxu0
  %2090 = vmatprep.mubr.bf16.mxu0 %v1438
  %2091 = vmatmul.mubr.bf16.gmra.mrb[0].mxu0 %v1437
  %v2092 = vpop.f32.mrb[0].mxu0
  %v2093 = vadd.f32 %v1996, %v2092
  %v2094 = vpop.f32.mrb[0].mxu0
  %v2095 = vpop.f32.mrb[0].mxu0
  %v2096 = vadd.f32 %v1999, %v2095
  %v2097 = vpop.f32.mrb[0].mxu0
  %2098 = vmatprep.mubr.bf16.mxu0 %v1462
  %2099 = vmatmul.mubr.bf16.gmra.mrb[0].mxu0 %v1461
  %v2100 = vpop.f32.mrb[0].mxu0
  %v2101 = vadd.f32 %v2004, %v2100
  %v2102 = vpop.f32.mrb[0].mxu0
  %v2103 = vpop.f32.mrb[0].mxu0
  %v2104 = vadd.f32 %v2007, %v2103
  %v2105 = vpop.f32.mrb[0].mxu0
  %2106 = vmatprep.mubr.bf16.mxu0 %v1486
  %2107 = vmatmul.mubr.bf16.gmra.mrb[0].mxu0 %v1485
  %v2108 = vpop.f32.mrb[0].mxu0
  %v2109 = vadd.f32 %v2012, %v2108
  %v2110 = vpop.f32.mrb[0].mxu0
  %v2111 = vpop.f32.mrb[0].mxu0
  %v2112 = vadd.f32 %v2015, %v2111
  %v2113 = vpop.f32.mrb[0].mxu0
  %2114 = vmatprep.mubr.bf16.mxu0 %v1510
  %2115 = vmatmul.mubr.bf16.gmra.mrb[0].mxu0 %v1509
  %v2116 = vpop.f32.mrb[0].mxu0
  %v2117 = vadd.f32 %v2020, %v2116
  %v2118 = vpop.f32.mrb[0].mxu0
  %v2119 = vpop.f32.mrb[0].mxu0
  %v2120 = vadd.f32 %v2023, %v2119
  %v2121 = vpop.f32.mrb[0].mxu0
  %2122 = vmatprep.mubr.bf16.mxu0 %v1534
  %2123 = vmatmul.mubr.bf16.gmra.mrb[0].mxu0 %v1533
  %v2124 = vpop.f32.mrb[0].mxu0
  %v2125 = vadd.f32 %v2028, %v2124
  %v2126 = vpop.f32.mrb[0].mxu0
  %v2127 = vpop.f32.mrb[0].mxu0
  %v2128 = vadd.f32 %v2031, %v2127
  %v2129 = vpop.f32.mrb[0].mxu0
  %2130 = vdwg.mxu0
  %2131 = vmatprep.subr.bf16.mxu0 0
  %2132 = vmatpush1.bf16.msra.mxu0 %v463
  %2133 = vmatprep.subr.bf16.mxu0 0
  %2134 = vmatpush1.bf16.msra.mxu0 %v464
  %2135 = vmatprep.subr.bf16.mxu0 0
  %2136 = vmatpush1.bf16.msra.mxu0 %v465
  %2137 = vmatprep.subr.bf16.mxu0 0
  %2138 = vmatpush1.bf16.msra.mxu0 %v466
  %2139 = vmatprep.subr.bf16.mxu0 0
  %2140 = vmatpush1.bf16.msra.mxu0 %v467
  %2141 = vmatprep.subr.bf16.mxu0 0
  %2142 = vmatpush1.bf16.msra.mxu0 %v468
  %2143 = vmatprep.subr.bf16.mxu0 0
  %2144 = vmatpush1.bf16.msra.mxu0 %v469
  %2145 = vmatprep.subr.bf16.mxu0 0
  %2146 = vmatpush1.bf16.msra.mxu0 %v470
  %2147 = vmatprep.subr.bf16.mxu0 0
  %2148 = vmatpush1.bf16.msra.mxu0 %v471
  %2149 = vmatprep.subr.bf16.mxu0 0
  %2150 = vmatpush1.bf16.msra.mxu0 %v472
  %2151 = vmatprep.subr.bf16.mxu0 0
  %2152 = vmatpush1.bf16.msra.mxu0 %v473
  %2153 = vmatprep.subr.bf16.mxu0 0
  %2154 = vmatpush1.bf16.msra.mxu0 %v474
  %2155 = vmatprep.subr.bf16.mxu0 0
  %2156 = vmatpush1.bf16.msra.mxu0 %v475
  %2157 = vmatprep.subr.bf16.mxu0 0
  %2158 = vmatpush1.bf16.msra.mxu0 %v476
  %2159 = vmatprep.subr.bf16.mxu0 0
  %2160 = vmatpush1.bf16.msra.mxu0 %v477
  %2161 = vmatprep.subr.bf16.mxu0 0
  %2162 = vmatpush1.bf16.msra.mxu0 %v478
  %2163 = vmatprep.mubr.bf16.mxu0 %v1368
  %2164 = vmatmul.mubr.bf16.gmra.mrb[0].mxu0 %v1367
  %v2165 = vpop.f32.mrb[0].mxu0
  %v2166 = vadd.f32 %v2069, %v2165
  %v2167 = vpop.f32.mrb[0].mxu0
  %v2168 = vpop.f32.mrb[0].mxu0
  %v2169 = vadd.f32 %v2072, %v2168
  %v2170 = vpop.f32.mrb[0].mxu0
  %2171 = vmatprep.mubr.bf16.mxu0 %v1392
  %2172 = vmatmul.mubr.bf16.gmra.mrb[0].mxu0 %v1391
  %v2173 = vpop.f32.mrb[0].mxu0
  %v2174 = vadd.f32 %v2077, %v2173
  %v2175 = vpop.f32.mrb[0].mxu0
  %v2176 = vpop.f32.mrb[0].mxu0
  %v2177 = vadd.f32 %v2080, %v2176
  %v2178 = vpop.f32.mrb[0].mxu0
  %2179 = vmatprep.mubr.bf16.mxu0 %v1416
  %2180 = vmatmul.mubr.bf16.gmra.mrb[0].mxu0 %v1415
  %v2181 = vpop.f32.mrb[0].mxu0
  %v2182 = vadd.f32 %v2085, %v2181
  %v2183 = vpop.f32.mrb[0].mxu0
  %v2184 = vpop.f32.mrb[0].mxu0
  %v2185 = vadd.f32 %v2088, %v2184
  %v2186 = vpop.f32.mrb[0].mxu0
  %2187 = vmatprep.mubr.bf16.mxu0 %v1440
  %2188 = vmatmul.mubr.bf16.gmra.mrb[0].mxu0 %v1439
  %v2189 = vpop.f32.mrb[0].mxu0
  %v2190 = vadd.f32 %v2093, %v2189
  %v2191 = vpop.f32.mrb[0].mxu0
  %v2192 = vpop.f32.mrb[0].mxu0
  %v2193 = vadd.f32 %v2096, %v2192
  %v2194 = vpop.f32.mrb[0].mxu0
  %2195 = vmatprep.mubr.bf16.mxu0 %v1464
  %2196 = vmatmul.mubr.bf16.gmra.mrb[0].mxu0 %v1463
  %v2197 = vpop.f32.mrb[0].mxu0
  %v2198 = vadd.f32 %v2101, %v2197
  %v2199 = vpop.f32.mrb[0].mxu0
  %v2200 = vpop.f32.mrb[0].mxu0
  %v2201 = vadd.f32 %v2104, %v2200
  %v2202 = vpop.f32.mrb[0].mxu0
  %2203 = vmatprep.mubr.bf16.mxu0 %v1488
  %2204 = vmatmul.mubr.bf16.gmra.mrb[0].mxu0 %v1487
  %v2205 = vpop.f32.mrb[0].mxu0
  %v2206 = vadd.f32 %v2109, %v2205
  %v2207 = vpop.f32.mrb[0].mxu0
  %v2208 = vpop.f32.mrb[0].mxu0
  %v2209 = vadd.f32 %v2112, %v2208
  %v2210 = vpop.f32.mrb[0].mxu0
  %2211 = vmatprep.mubr.bf16.mxu0 %v1512
  %2212 = vmatmul.mubr.bf16.gmra.mrb[0].mxu0 %v1511
  %v2213 = vpop.f32.mrb[0].mxu0
  %v2214 = vadd.f32 %v2117, %v2213
  %v2215 = vpop.f32.mrb[0].mxu0
  %v2216 = vpop.f32.mrb[0].mxu0
  %v2217 = vadd.f32 %v2120, %v2216
  %v2218 = vpop.f32.mrb[0].mxu0
  %2219 = vmatprep.mubr.bf16.mxu0 %v1536
  %2220 = vmatmul.mubr.bf16.gmra.mrb[0].mxu0 %v1535
  %v2221 = vpop.f32.mrb[0].mxu0
  %v2222 = vadd.f32 %v2125, %v2221
  %v2223 = vpop.f32.mrb[0].mxu0
  %v2224 = vpop.f32.mrb[0].mxu0
  %v2225 = vadd.f32 %v2128, %v2224
  %v2226 = vpop.f32.mrb[0].mxu0
  %2227 = vdwg.mxu0
  %2228 = vmatprep.subr.bf16.mxu0 0
  %2229 = vmatpush1.bf16.msra.mxu0 %v479
  %2230 = vmatprep.subr.bf16.mxu0 0
  %2231 = vmatpush1.bf16.msra.mxu0 %v480
  %2232 = vmatprep.subr.bf16.mxu0 0
  %2233 = vmatpush1.bf16.msra.mxu0 %v481
  %2234 = vmatprep.subr.bf16.mxu0 0
  %2235 = vmatpush1.bf16.msra.mxu0 %v482
  %2236 = vmatprep.subr.bf16.mxu0 0
  %2237 = vmatpush1.bf16.msra.mxu0 %v483
  %2238 = vmatprep.subr.bf16.mxu0 0
  %2239 = vmatpush1.bf16.msra.mxu0 %v484
  %2240 = vmatprep.subr.bf16.mxu0 0
  %2241 = vmatpush1.bf16.msra.mxu0 %v485
  %2242 = vmatprep.subr.bf16.mxu0 0
  %2243 = vmatpush1.bf16.msra.mxu0 %v486
  %2244 = vmatprep.subr.bf16.mxu0 0
  %2245 = vmatpush1.bf16.msra.mxu0 %v487
  %2246 = vmatprep.subr.bf16.mxu0 0
  %2247 = vmatpush1.bf16.msra.mxu0 %v488
  %2248 = vmatprep.subr.bf16.mxu0 0
  %2249 = vmatpush1.bf16.msra.mxu0 %v489
  %2250 = vmatprep.subr.bf16.mxu0 0
  %2251 = vmatpush1.bf16.msra.mxu0 %v490
  %2252 = vmatprep.subr.bf16.mxu0 0
  %2253 = vmatpush1.bf16.msra.mxu0 %v491
  %2254 = vmatprep.subr.bf16.mxu0 0
  %2255 = vmatpush1.bf16.msra.mxu0 %v492
  %2256 = vmatprep.subr.bf16.mxu0 0
  %2257 = vmatpush1.bf16.msra.mxu0 %v493
  %2258 = vmatprep.subr.bf16.mxu0 0
  %2259 = vmatpush1.bf16.msra.mxu0 %v494
  %2260 = vmatprep.mubr.bf16.mxu0 %v1370
  %2261 = vmatmul.mubr.bf16.gmra.mrb[0].mxu0 %v1369
  %v2262 = vpop.f32.mrb[0].mxu0
  %v2263 = vadd.f32 %v2166, %v2262
  %v2264 = vpop.f32.mrb[0].mxu0
  %v2265 = vpop.f32.mrb[0].mxu0
  %v2266 = vadd.f32 %v2169, %v2265
  %v2267 = vpop.f32.mrb[0].mxu0
  %2268 = vmatprep.mubr.bf16.mxu0 %v1394
  %2269 = vmatmul.mubr.bf16.gmra.mrb[0].mxu0 %v1393
  %v2270 = vpop.f32.mrb[0].mxu0
  %v2271 = vadd.f32 %v2174, %v2270
  %v2272 = vpop.f32.mrb[0].mxu0
  %v2273 = vpop.f32.mrb[0].mxu0
  %v2274 = vadd.f32 %v2177, %v2273
  %v2275 = vpop.f32.mrb[0].mxu0
  %2276 = vmatprep.mubr.bf16.mxu0 %v1418
  %2277 = vmatmul.mubr.bf16.gmra.mrb[0].mxu0 %v1417
  %v2278 = vpop.f32.mrb[0].mxu0
  %v2279 = vadd.f32 %v2182, %v2278
  %v2280 = vpop.f32.mrb[0].mxu0
  %v2281 = vpop.f32.mrb[0].mxu0
  %v2282 = vadd.f32 %v2185, %v2281
  %v2283 = vpop.f32.mrb[0].mxu0
  %2284 = vmatprep.mubr.bf16.mxu0 %v1442
  %2285 = vmatmul.mubr.bf16.gmra.mrb[0].mxu0 %v1441
  %v2286 = vpop.f32.mrb[0].mxu0
  %v2287 = vadd.f32 %v2190, %v2286
  %v2288 = vpop.f32.mrb[0].mxu0
  %v2289 = vpop.f32.mrb[0].mxu0
  %v2290 = vadd.f32 %v2193, %v2289
  %v2291 = vpop.f32.mrb[0].mxu0
  %2292 = vmatprep.mubr.bf16.mxu0 %v1466
  %2293 = vmatmul.mubr.bf16.gmra.mrb[0].mxu0 %v1465
  %v2294 = vpop.f32.mrb[0].mxu0
  %v2295 = vadd.f32 %v2198, %v2294
  %v2296 = vpop.f32.mrb[0].mxu0
  %v2297 = vpop.f32.mrb[0].mxu0
  %v2298 = vadd.f32 %v2201, %v2297
  %v2299 = vpop.f32.mrb[0].mxu0
  %2300 = vmatprep.mubr.bf16.mxu0 %v1490
  %2301 = vmatmul.mubr.bf16.gmra.mrb[0].mxu0 %v1489
  %v2302 = vpop.f32.mrb[0].mxu0
  %v2303 = vadd.f32 %v2206, %v2302
  %v2304 = vpop.f32.mrb[0].mxu0
  %v2305 = vpop.f32.mrb[0].mxu0
  %v2306 = vadd.f32 %v2209, %v2305
  %v2307 = vpop.f32.mrb[0].mxu0
  %2308 = vmatprep.mubr.bf16.mxu0 %v1514
  %2309 = vmatmul.mubr.bf16.gmra.mrb[0].mxu0 %v1513
  %v2310 = vpop.f32.mrb[0].mxu0
  %v2311 = vadd.f32 %v2214, %v2310
  %v2312 = vpop.f32.mrb[0].mxu0
  %v2313 = vpop.f32.mrb[0].mxu0
  %v2314 = vadd.f32 %v2217, %v2313
  %v2315 = vpop.f32.mrb[0].mxu0
  %2316 = vmatprep.mubr.bf16.mxu0 %v1538
  %2317 = vmatmul.mubr.bf16.gmra.mrb[0].mxu0 %v1537
  %v2318 = vpop.f32.mrb[0].mxu0
  %v2319 = vadd.f32 %v2222, %v2318
  %v2320 = vpop.f32.mrb[0].mxu0
  %v2321 = vpop.f32.mrb[0].mxu0
  %v2322 = vadd.f32 %v2225, %v2321
  %v2323 = vpop.f32.mrb[0].mxu0
  %2324 = vdwg.mxu0
  %2325 = vmatprep.subr.bf16.mxu0 0
  %2326 = vmatpush1.bf16.msra.mxu0 %v495
  %2327 = vmatprep.subr.bf16.mxu0 0
  %2328 = vmatpush1.bf16.msra.mxu0 %v496
  %2329 = vmatprep.subr.bf16.mxu0 0
  %2330 = vmatpush1.bf16.msra.mxu0 %v497
  %2331 = vmatprep.subr.bf16.mxu0 0
  %2332 = vmatpush1.bf16.msra.mxu0 %v498
  %2333 = vmatprep.subr.bf16.mxu0 0
  %2334 = vmatpush1.bf16.msra.mxu0 %v499
  %2335 = vmatprep.subr.bf16.mxu0 0
  %2336 = vmatpush1.bf16.msra.mxu0 %v500
  %2337 = vmatprep.subr.bf16.mxu0 0
  %2338 = vmatpush1.bf16.msra.mxu0 %v501
  %2339 = vmatprep.subr.bf16.mxu0 0
  %2340 = vmatpush1.bf16.msra.mxu0 %v502
  %2341 = vmatprep.subr.bf16.mxu0 0
  %2342 = vmatpush1.bf16.msra.mxu0 %v503
  %2343 = vmatprep.subr.bf16.mxu0 0
  %2344 = vmatpush1.bf16.msra.mxu0 %v504
  %2345 = vmatprep.subr.bf16.mxu0 0
  %2346 = vmatpush1.bf16.msra.mxu0 %v505
  %2347 = vmatprep.subr.bf16.mxu0 0
  %2348 = vmatpush1.bf16.msra.mxu0 %v506
  %2349 = vmatprep.subr.bf16.mxu0 0
  %2350 = vmatpush1.bf16.msra.mxu0 %v507
  %2351 = vmatprep.subr.bf16.mxu0 0
  %2352 = vmatpush1.bf16.msra.mxu0 %v508
  %2353 = vmatprep.subr.bf16.mxu0 0
  %2354 = vmatpush1.bf16.msra.mxu0 %v509
  %2355 = vmatprep.subr.bf16.mxu0 0
  %2356 = vmatpush1.bf16.msra.mxu0 %v510
  %2357 = vmatprep.mubr.bf16.mxu0 %v1372
  %2358 = vmatmul.mubr.bf16.gmra.mrb[0].mxu0 %v1371
  %v2359 = vpop.f32.mrb[0].mxu0
  %v2360 = vadd.f32 %v2263, %v2359
  %v2361 = vpop.f32.mrb[0].mxu0
  %v2362 = vpop.f32.mrb[0].mxu0
  %v2363 = vadd.f32 %v2266, %v2362
  %v2364 = vpop.f32.mrb[0].mxu0
  %2365 = vmatprep.mubr.bf16.mxu0 %v1396
  %2366 = vmatmul.mubr.bf16.gmra.mrb[0].mxu0 %v1395
  %v2367 = vpop.f32.mrb[0].mxu0
  %v2368 = vadd.f32 %v2271, %v2367
  %v2369 = vpop.f32.mrb[0].mxu0
  %v2370 = vpop.f32.mrb[0].mxu0
  %v2371 = vadd.f32 %v2274, %v2370
  %v2372 = vpop.f32.mrb[0].mxu0
  %2373 = vmatprep.mubr.bf16.mxu0 %v1420
  %2374 = vmatmul.mubr.bf16.gmra.mrb[0].mxu0 %v1419
  %v2375 = vpop.f32.mrb[0].mxu0
  %v2376 = vadd.f32 %v2279, %v2375
  %v2377 = vpop.f32.mrb[0].mxu0
  %v2378 = vpop.f32.mrb[0].mxu0
  %v2379 = vadd.f32 %v2282, %v2378
  %v2380 = vpop.f32.mrb[0].mxu0
  %2381 = vmatprep.mubr.bf16.mxu0 %v1444
  %2382 = vmatmul.mubr.bf16.gmra.mrb[0].mxu0 %v1443
  %v2383 = vpop.f32.mrb[0].mxu0
  %v2384 = vadd.f32 %v2287, %v2383
  %v2385 = vpop.f32.mrb[0].mxu0
  %v2386 = vpop.f32.mrb[0].mxu0
  %v2387 = vadd.f32 %v2290, %v2386
  %v2388 = vpop.f32.mrb[0].mxu0
  %2389 = vmatprep.mubr.bf16.mxu0 %v1468
  %2390 = vmatmul.mubr.bf16.gmra.mrb[0].mxu0 %v1467
  %v2391 = vpop.f32.mrb[0].mxu0
  %v2392 = vadd.f32 %v2295, %v2391
  %v2393 = vpop.f32.mrb[0].mxu0
  %v2394 = vpop.f32.mrb[0].mxu0
  %v2395 = vadd.f32 %v2298, %v2394
  %v2396 = vpop.f32.mrb[0].mxu0
  %2397 = vmatprep.mubr.bf16.mxu0 %v1492
  %2398 = vmatmul.mubr.bf16.gmra.mrb[0].mxu0 %v1491
  %v2399 = vpop.f32.mrb[0].mxu0
  %v2400 = vadd.f32 %v2303, %v2399
  %v2401 = vpop.f32.mrb[0].mxu0
  %v2402 = vpop.f32.mrb[0].mxu0
  %v2403 = vadd.f32 %v2306, %v2402
  %v2404 = vpop.f32.mrb[0].mxu0
  %2405 = vmatprep.mubr.bf16.mxu0 %v1516
  %2406 = vmatmul.mubr.bf16.gmra.mrb[0].mxu0 %v1515
  %v2407 = vpop.f32.mrb[0].mxu0
  %v2408 = vadd.f32 %v2311, %v2407
  %v2409 = vpop.f32.mrb[0].mxu0
  %v2410 = vpop.f32.mrb[0].mxu0
  %v2411 = vadd.f32 %v2314, %v2410
  %v2412 = vpop.f32.mrb[0].mxu0
  %2413 = vmatprep.mubr.bf16.mxu0 %v1540
  %2414 = vmatmul.mubr.bf16.gmra.mrb[0].mxu0 %v1539
  %v2415 = vpop.f32.mrb[0].mxu0
  %v2416 = vadd.f32 %v2319, %v2415
  %v2417 = vpop.f32.mrb[0].mxu0
  %v2418 = vpop.f32.mrb[0].mxu0
  %v2419 = vadd.f32 %v2322, %v2418
  %v2420 = vpop.f32.mrb[0].mxu0
  %2421 = vdwg.mxu0
  %2422 = vmatprep.subr.bf16.mxu0 0
  %2423 = vmatpush1.bf16.msra.mxu0 %v511
  %2424 = vmatprep.subr.bf16.mxu0 0
  %2425 = vmatpush1.bf16.msra.mxu0 %v512
  %2426 = vmatprep.subr.bf16.mxu0 0
  %2427 = vmatpush1.bf16.msra.mxu0 %v513
  %2428 = vmatprep.subr.bf16.mxu0 0
  %2429 = vmatpush1.bf16.msra.mxu0 %v514
  %2430 = vmatprep.subr.bf16.mxu0 0
  %2431 = vmatpush1.bf16.msra.mxu0 %v515
  %2432 = vmatprep.subr.bf16.mxu0 0
  %2433 = vmatpush1.bf16.msra.mxu0 %v516
  %2434 = vmatprep.subr.bf16.mxu0 0
  %2435 = vmatpush1.bf16.msra.mxu0 %v517
  %2436 = vmatprep.subr.bf16.mxu0 0
  %2437 = vmatpush1.bf16.msra.mxu0 %v518
  %2438 = vmatprep.subr.bf16.mxu0 0
  %2439 = vmatpush1.bf16.msra.mxu0 %v519
  %2440 = vmatprep.subr.bf16.mxu0 0
  %2441 = vmatpush1.bf16.msra.mxu0 %v520
  %2442 = vmatprep.subr.bf16.mxu0 0
  %2443 = vmatpush1.bf16.msra.mxu0 %v521
  %2444 = vmatprep.subr.bf16.mxu0 0
  %2445 = vmatpush1.bf16.msra.mxu0 %v522
  %2446 = vmatprep.subr.bf16.mxu0 0
  %2447 = vmatpush1.bf16.msra.mxu0 %v523
  %2448 = vmatprep.subr.bf16.mxu0 0
  %2449 = vmatpush1.bf16.msra.mxu0 %v524
  %2450 = vmatprep.subr.bf16.mxu0 0
  %2451 = vmatpush1.bf16.msra.mxu0 %v525
  %2452 = vmatprep.subr.bf16.mxu0 0
  %2453 = vmatpush1.bf16.msra.mxu0 %v526
  %2454 = vmatprep.mubr.bf16.mxu0 %v1374
  %2455 = vmatmul.mubr.bf16.gmra.mrb[0].mxu0 %v1373
  %v2456 = vpop.f32.mrb[0].mxu0
  %v2457 = vadd.f32 %v2360, %v2456
  %v2458 = vpop.f32.mrb[0].mxu0
  %v2459 = vpop.f32.mrb[0].mxu0
  %v2460 = vadd.f32 %v2363, %v2459
  %v2461 = vpop.f32.mrb[0].mxu0
  %2462 = vmatprep.mubr.bf16.mxu0 %v1398
  %2463 = vmatmul.mubr.bf16.gmra.mrb[0].mxu0 %v1397
  %v2464 = vpop.f32.mrb[0].mxu0
  %v2465 = vadd.f32 %v2368, %v2464
  %v2466 = vpop.f32.mrb[0].mxu0
  %v2467 = vpop.f32.mrb[0].mxu0
  %v2468 = vadd.f32 %v2371, %v2467
  %v2469 = vpop.f32.mrb[0].mxu0
  %2470 = vmatprep.mubr.bf16.mxu0 %v1422
  %2471 = vmatmul.mubr.bf16.gmra.mrb[0].mxu0 %v1421
  %v2472 = vpop.f32.mrb[0].mxu0
  %v2473 = vadd.f32 %v2376, %v2472
  %v2474 = vpop.f32.mrb[0].mxu0
  %v2475 = vpop.f32.mrb[0].mxu0
  %v2476 = vadd.f32 %v2379, %v2475
  %v2477 = vpop.f32.mrb[0].mxu0
  %2478 = vmatprep.mubr.bf16.mxu0 %v1446
  %2479 = vmatmul.mubr.bf16.gmra.mrb[0].mxu0 %v1445
  %v2480 = vpop.f32.mrb[0].mxu0
  %v2481 = vadd.f32 %v2384, %v2480
  %v2482 = vpop.f32.mrb[0].mxu0
  %v2483 = vpop.f32.mrb[0].mxu0
  %v2484 = vadd.f32 %v2387, %v2483
  %v2485 = vpop.f32.mrb[0].mxu0
  %2486 = vmatprep.mubr.bf16.mxu0 %v1470
  %2487 = vmatmul.mubr.bf16.gmra.mrb[0].mxu0 %v1469
  %v2488 = vpop.f32.mrb[0].mxu0
  %v2489 = vadd.f32 %v2392, %v2488
  %v2490 = vpop.f32.mrb[0].mxu0
  %v2491 = vpop.f32.mrb[0].mxu0
  %v2492 = vadd.f32 %v2395, %v2491
  %v2493 = vpop.f32.mrb[0].mxu0
  %2494 = vmatprep.mubr.bf16.mxu0 %v1494
  %2495 = vmatmul.mubr.bf16.gmra.mrb[0].mxu0 %v1493
  %v2496 = vpop.f32.mrb[0].mxu0
  %v2497 = vadd.f32 %v2400, %v2496
  %v2498 = vpop.f32.mrb[0].mxu0
  %v2499 = vpop.f32.mrb[0].mxu0
  %v2500 = vadd.f32 %v2403, %v2499
  %v2501 = vpop.f32.mrb[0].mxu0
  %2502 = vmatprep.mubr.bf16.mxu0 %v1518
  %2503 = vmatmul.mubr.bf16.gmra.mrb[0].mxu0 %v1517
  %v2504 = vpop.f32.mrb[0].mxu0
  %v2505 = vadd.f32 %v2408, %v2504
  %v2506 = vpop.f32.mrb[0].mxu0
  %v2507 = vpop.f32.mrb[0].mxu0
  %v2508 = vadd.f32 %v2411, %v2507
  %v2509 = vpop.f32.mrb[0].mxu0
  %2510 = vmatprep.mubr.bf16.mxu0 %v1542
  %2511 = vmatmul.mubr.bf16.gmra.mrb[0].mxu0 %v1541
  %v2512 = vpop.f32.mrb[0].mxu0
  %v2513 = vadd.f32 %v2416, %v2512
  %v2514 = vpop.f32.mrb[0].mxu0
  %v2515 = vpop.f32.mrb[0].mxu0
  %v2516 = vadd.f32 %v2419, %v2515
  %v2517 = vpop.f32.mrb[0].mxu0
  %2518 = vdwg.mxu0
  %2519 = vmatprep.subr.bf16.mxu0 0
  %2520 = vmatpush1.bf16.msra.mxu0 %v527
  %2521 = vmatprep.subr.bf16.mxu0 0
  %2522 = vmatpush1.bf16.msra.mxu0 %v528
  %2523 = vmatprep.subr.bf16.mxu0 0
  %2524 = vmatpush1.bf16.msra.mxu0 %v529
  %2525 = vmatprep.subr.bf16.mxu0 0
  %2526 = vmatpush1.bf16.msra.mxu0 %v530
  %2527 = vmatprep.subr.bf16.mxu0 0
  %2528 = vmatpush1.bf16.msra.mxu0 %v531
  %2529 = vmatprep.subr.bf16.mxu0 0
  %2530 = vmatpush1.bf16.msra.mxu0 %v532
  %2531 = vmatprep.subr.bf16.mxu0 0
  %2532 = vmatpush1.bf16.msra.mxu0 %v533
  %2533 = vmatprep.subr.bf16.mxu0 0
  %2534 = vmatpush1.bf16.msra.mxu0 %v534
  %2535 = vmatprep.subr.bf16.mxu0 0
  %2536 = vmatpush1.bf16.msra.mxu0 %v535
  %2537 = vmatprep.subr.bf16.mxu0 0
  %2538 = vmatpush1.bf16.msra.mxu0 %v536
  %2539 = vmatprep.subr.bf16.mxu0 0
  %2540 = vmatpush1.bf16.msra.mxu0 %v537
  %2541 = vmatprep.subr.bf16.mxu0 0
  %2542 = vmatpush1.bf16.msra.mxu0 %v538
  %2543 = vmatprep.subr.bf16.mxu0 0
  %2544 = vmatpush1.bf16.msra.mxu0 %v539
  %2545 = vmatprep.subr.bf16.mxu0 0
  %2546 = vmatpush1.bf16.msra.mxu0 %v540
  %2547 = vmatprep.subr.bf16.mxu0 0
  %2548 = vmatpush1.bf16.msra.mxu0 %v541
  %2549 = vmatprep.subr.bf16.mxu0 0
  %2550 = vmatpush1.bf16.msra.mxu0 %v542
  %2551 = vmatprep.mubr.bf16.mxu0 %v1376
  %2552 = vmatmul.mubr.bf16.gmra.mrb[0].mxu0 %v1375
  %v2553 = vpop.f32.mrb[0].mxu0
  %v2554 = vadd.f32 %v2457, %v2553
  %v2555 = vpop.f32.mrb[0].mxu0
  %v2556 = vpop.f32.mrb[0].mxu0
  %v2557 = vadd.f32 %v2460, %v2556
  %v2558 = vpop.f32.mrb[0].mxu0
  %2559 = vmatprep.mubr.bf16.mxu0 %v1400
  %2560 = vmatmul.mubr.bf16.gmra.mrb[0].mxu0 %v1399
  %v2561 = vpop.f32.mrb[0].mxu0
  %v2562 = vadd.f32 %v2465, %v2561
  %v2563 = vpop.f32.mrb[0].mxu0
  %v2564 = vpop.f32.mrb[0].mxu0
  %v2565 = vadd.f32 %v2468, %v2564
  %v2566 = vpop.f32.mrb[0].mxu0
  %2567 = vmatprep.mubr.bf16.mxu0 %v1424
  %2568 = vmatmul.mubr.bf16.gmra.mrb[0].mxu0 %v1423
  %v2569 = vpop.f32.mrb[0].mxu0
  %v2570 = vadd.f32 %v2473, %v2569
  %v2571 = vpop.f32.mrb[0].mxu0
  %v2572 = vpop.f32.mrb[0].mxu0
  %v2573 = vadd.f32 %v2476, %v2572
  %v2574 = vpop.f32.mrb[0].mxu0
  %2575 = vmatprep.mubr.bf16.mxu0 %v1448
  %2576 = vmatmul.mubr.bf16.gmra.mrb[0].mxu0 %v1447
  %v2577 = vpop.f32.mrb[0].mxu0
  %v2578 = vadd.f32 %v2481, %v2577
  %v2579 = vpop.f32.mrb[0].mxu0
  %v2580 = vpop.f32.mrb[0].mxu0
  %v2581 = vadd.f32 %v2484, %v2580
  %v2582 = vpop.f32.mrb[0].mxu0
  %2583 = vmatprep.mubr.bf16.mxu0 %v1472
  %2584 = vmatmul.mubr.bf16.gmra.mrb[0].mxu0 %v1471
  %v2585 = vpop.f32.mrb[0].mxu0
  %v2586 = vadd.f32 %v2489, %v2585
  %v2587 = vpop.f32.mrb[0].mxu0
  %v2588 = vpop.f32.mrb[0].mxu0
  %v2589 = vadd.f32 %v2492, %v2588
  %v2590 = vpop.f32.mrb[0].mxu0
  %2591 = vmatprep.mubr.bf16.mxu0 %v1496
  %2592 = vmatmul.mubr.bf16.gmra.mrb[0].mxu0 %v1495
  %v2593 = vpop.f32.mrb[0].mxu0
  %v2594 = vadd.f32 %v2497, %v2593
  %v2595 = vpop.f32.mrb[0].mxu0
  %v2596 = vpop.f32.mrb[0].mxu0
  %v2597 = vadd.f32 %v2500, %v2596
  %v2598 = vpop.f32.mrb[0].mxu0
  %2599 = vmatprep.mubr.bf16.mxu0 %v1520
  %2600 = vmatmul.mubr.bf16.gmra.mrb[0].mxu0 %v1519
  %v2601 = vpop.f32.mrb[0].mxu0
  %v2602 = vadd.f32 %v2505, %v2601
  %v2603 = vpop.f32.mrb[0].mxu0
  %v2604 = vpop.f32.mrb[0].mxu0
  %v2605 = vadd.f32 %v2508, %v2604
  %v2606 = vpop.f32.mrb[0].mxu0
  %2607 = vmatprep.mubr.bf16.mxu0 %v1544
  %2608 = vmatmul.mubr.bf16.gmra.mrb[0].mxu0 %v1543
  %v2609 = vpop.f32.mrb[0].mxu0
  %v2610 = vadd.f32 %v2513, %v2609
  %v2611 = vpop.f32.mrb[0].mxu0
  %v2612 = vpop.f32.mrb[0].mxu0
  %v2613 = vadd.f32 %v2516, %v2612
  %v2614 = vpop.f32.mrb[0].mxu0
  %2615 = vdwg.mxu0
  %2616 = vmatprep.subr.bf16.mxu0 0
  %2617 = vmatpush1.bf16.msra.mxu0 %v543
  %2618 = vmatprep.subr.bf16.mxu0 0
  %2619 = vmatpush1.bf16.msra.mxu0 %v544
  %2620 = vmatprep.subr.bf16.mxu0 0
  %2621 = vmatpush1.bf16.msra.mxu0 %v545
  %2622 = vmatprep.subr.bf16.mxu0 0
  %2623 = vmatpush1.bf16.msra.mxu0 %v546
  %2624 = vmatprep.subr.bf16.mxu0 0
  %2625 = vmatpush1.bf16.msra.mxu0 %v547
  %2626 = vmatprep.subr.bf16.mxu0 0
  %2627 = vmatpush1.bf16.msra.mxu0 %v548
  %2628 = vmatprep.subr.bf16.mxu0 0
  %2629 = vmatpush1.bf16.msra.mxu0 %v549
  %2630 = vmatprep.subr.bf16.mxu0 0
  %2631 = vmatpush1.bf16.msra.mxu0 %v550
  %2632 = vmatprep.subr.bf16.mxu0 0
  %2633 = vmatpush1.bf16.msra.mxu0 %v551
  %2634 = vmatprep.subr.bf16.mxu0 0
  %2635 = vmatpush1.bf16.msra.mxu0 %v552
  %2636 = vmatprep.subr.bf16.mxu0 0
  %2637 = vmatpush1.bf16.msra.mxu0 %v553
  %2638 = vmatprep.subr.bf16.mxu0 0
  %2639 = vmatpush1.bf16.msra.mxu0 %v554
  %2640 = vmatprep.subr.bf16.mxu0 0
  %2641 = vmatpush1.bf16.msra.mxu0 %v555
  %2642 = vmatprep.subr.bf16.mxu0 0
  %2643 = vmatpush1.bf16.msra.mxu0 %v556
  %2644 = vmatprep.subr.bf16.mxu0 0
  %2645 = vmatpush1.bf16.msra.mxu0 %v557
  %2646 = vmatprep.subr.bf16.mxu0 0
  %2647 = vmatpush1.bf16.msra.mxu0 %v558
  %2648 = vmatprep.mubr.bf16.mxu0 %v1378
  %2649 = vmatmul.mubr.bf16.gmra.mrb[0].mxu0 %v1377
  %v2650 = vpop.f32.mrb[0].mxu0
  %v2651 = vadd.f32 %v2554, %v2650
  %v2652 = vpop.f32.mrb[0].mxu0
  %v2653 = vpop.f32.mrb[0].mxu0
  %v2654 = vadd.f32 %v2557, %v2653
  %v2655 = vpop.f32.mrb[0].mxu0
  %2656 = vmatprep.mubr.bf16.mxu0 %v1402
  %2657 = vmatmul.mubr.bf16.gmra.mrb[0].mxu0 %v1401
  %v2658 = vpop.f32.mrb[0].mxu0
  %v2659 = vadd.f32 %v2562, %v2658
  %v2660 = vpop.f32.mrb[0].mxu0
  %v2661 = vpop.f32.mrb[0].mxu0
  %v2662 = vadd.f32 %v2565, %v2661
  %v2663 = vpop.f32.mrb[0].mxu0
  %2664 = vmatprep.mubr.bf16.mxu0 %v1426
  %2665 = vmatmul.mubr.bf16.gmra.mrb[0].mxu0 %v1425
  %v2666 = vpop.f32.mrb[0].mxu0
  %v2667 = vadd.f32 %v2570, %v2666
  %v2668 = vpop.f32.mrb[0].mxu0
  %v2669 = vpop.f32.mrb[0].mxu0
  %v2670 = vadd.f32 %v2573, %v2669
  %v2671 = vpop.f32.mrb[0].mxu0
  %2672 = vmatprep.mubr.bf16.mxu0 %v1450
  %2673 = vmatmul.mubr.bf16.gmra.mrb[0].mxu0 %v1449
  %v2674 = vpop.f32.mrb[0].mxu0
  %v2675 = vadd.f32 %v2578, %v2674
  %v2676 = vpop.f32.mrb[0].mxu0
  %v2677 = vpop.f32.mrb[0].mxu0
  %v2678 = vadd.f32 %v2581, %v2677
  %v2679 = vpop.f32.mrb[0].mxu0
  %2680 = vmatprep.mubr.bf16.mxu0 %v1474
  %2681 = vmatmul.mubr.bf16.gmra.mrb[0].mxu0 %v1473
  %v2682 = vpop.f32.mrb[0].mxu0
  %v2683 = vadd.f32 %v2586, %v2682
  %v2684 = vpop.f32.mrb[0].mxu0
  %v2685 = vpop.f32.mrb[0].mxu0
  %v2686 = vadd.f32 %v2589, %v2685
  %v2687 = vpop.f32.mrb[0].mxu0
  %2688 = vmatprep.mubr.bf16.mxu0 %v1498
  %2689 = vmatmul.mubr.bf16.gmra.mrb[0].mxu0 %v1497
  %v2690 = vpop.f32.mrb[0].mxu0
  %v2691 = vadd.f32 %v2594, %v2690
  %v2692 = vpop.f32.mrb[0].mxu0
  %v2693 = vpop.f32.mrb[0].mxu0
  %v2694 = vadd.f32 %v2597, %v2693
  %v2695 = vpop.f32.mrb[0].mxu0
  %2696 = vmatprep.mubr.bf16.mxu0 %v1522
  %2697 = vmatmul.mubr.bf16.gmra.mrb[0].mxu0 %v1521
  %v2698 = vpop.f32.mrb[0].mxu0
  %v2699 = vadd.f32 %v2602, %v2698
  %v2700 = vpop.f32.mrb[0].mxu0
  %v2701 = vpop.f32.mrb[0].mxu0
  %v2702 = vadd.f32 %v2605, %v2701
  %v2703 = vpop.f32.mrb[0].mxu0
  %2704 = vmatprep.mubr.bf16.mxu0 %v1546
  %2705 = vmatmul.mubr.bf16.gmra.mrb[0].mxu0 %v1545
  %v2706 = vpop.f32.mrb[0].mxu0
  %v2707 = vadd.f32 %v2610, %v2706
  %v2708 = vpop.f32.mrb[0].mxu0
  %v2709 = vpop.f32.mrb[0].mxu0
  %v2710 = vadd.f32 %v2613, %v2709
  %v2711 = vpop.f32.mrb[0].mxu0
  %2712 = vdwg.mxu0
  %2713 = vmatprep.subr.bf16.mxu0 0
  %2714 = vmatpush1.bf16.msra.mxu0 %v559
  %2715 = vmatprep.subr.bf16.mxu0 0
  %2716 = vmatpush1.bf16.msra.mxu0 %v560
  %2717 = vmatprep.subr.bf16.mxu0 0
  %2718 = vmatpush1.bf16.msra.mxu0 %v561
  %2719 = vmatprep.subr.bf16.mxu0 0
  %2720 = vmatpush1.bf16.msra.mxu0 %v562
  %2721 = vmatprep.subr.bf16.mxu0 0
  %2722 = vmatpush1.bf16.msra.mxu0 %v563
  %2723 = vmatprep.subr.bf16.mxu0 0
  %2724 = vmatpush1.bf16.msra.mxu0 %v564
  %2725 = vmatprep.subr.bf16.mxu0 0
  %2726 = vmatpush1.bf16.msra.mxu0 %v565
  %2727 = vmatprep.subr.bf16.mxu0 0
  %2728 = vmatpush1.bf16.msra.mxu0 %v566
  %2729 = vmatprep.subr.bf16.mxu0 0
  %2730 = vmatpush1.bf16.msra.mxu0 %v567
  %2731 = vmatprep.subr.bf16.mxu0 0
  %2732 = vmatpush1.bf16.msra.mxu0 %v568
  %2733 = vmatprep.subr.bf16.mxu0 0
  %2734 = vmatpush1.bf16.msra.mxu0 %v569
  %2735 = vmatprep.subr.bf16.mxu0 0
  %2736 = vmatpush1.bf16.msra.mxu0 %v570
  %2737 = vmatprep.subr.bf16.mxu0 0
  %2738 = vmatpush1.bf16.msra.mxu0 %v571
  %2739 = vmatprep.subr.bf16.mxu0 0
  %2740 = vmatpush1.bf16.msra.mxu0 %v572
  %2741 = vmatprep.subr.bf16.mxu0 0
  %2742 = vmatpush1.bf16.msra.mxu0 %v573
  %2743 = vmatprep.subr.bf16.mxu0 0
  %2744 = vmatpush1.bf16.msra.mxu0 %v574
  %2745 = vmatprep.mubr.bf16.mxu0 %v1380
  %2746 = vmatmul.mubr.bf16.gmra.mrb[0].mxu0 %v1379
  %v2747 = vpop.f32.mrb[0].mxu0
  %v2748 = vadd.f32 %v2651, %v2747
  %v2749 = vpop.f32.mrb[0].mxu0
  %v2750 = vpop.f32.mrb[0].mxu0
  %v2751 = vadd.f32 %v2654, %v2750
  %v2752 = vpop.f32.mrb[0].mxu0
  %2753 = vmatprep.mubr.bf16.mxu0 %v1404
  %2754 = vmatmul.mubr.bf16.gmra.mrb[0].mxu0 %v1403
  %v2755 = vpop.f32.mrb[0].mxu0
  %v2756 = vadd.f32 %v2659, %v2755
  %v2757 = vpop.f32.mrb[0].mxu0
  %v2758 = vpop.f32.mrb[0].mxu0
  %v2759 = vadd.f32 %v2662, %v2758
  %v2760 = vpop.f32.mrb[0].mxu0
  %2761 = vmatprep.mubr.bf16.mxu0 %v1428
  %2762 = vmatmul.mubr.bf16.gmra.mrb[0].mxu0 %v1427
  %v2763 = vpop.f32.mrb[0].mxu0
  %v2764 = vadd.f32 %v2667, %v2763
  %v2765 = vpop.f32.mrb[0].mxu0
  %v2766 = vpop.f32.mrb[0].mxu0
  %v2767 = vadd.f32 %v2670, %v2766
  %v2768 = vpop.f32.mrb[0].mxu0
  %2769 = vmatprep.mubr.bf16.mxu0 %v1452
  %2770 = vmatmul.mubr.bf16.gmra.mrb[0].mxu0 %v1451
  %v2771 = vpop.f32.mrb[0].mxu0
  %v2772 = vadd.f32 %v2675, %v2771
  %v2773 = vpop.f32.mrb[0].mxu0
  %v2774 = vpop.f32.mrb[0].mxu0
  %v2775 = vadd.f32 %v2678, %v2774
  %v2776 = vpop.f32.mrb[0].mxu0
  %2777 = vmatprep.mubr.bf16.mxu0 %v1476
  %2778 = vmatmul.mubr.bf16.gmra.mrb[0].mxu0 %v1475
  %v2779 = vpop.f32.mrb[0].mxu0
  %v2780 = vadd.f32 %v2683, %v2779
  %v2781 = vpop.f32.mrb[0].mxu0
  %v2782 = vpop.f32.mrb[0].mxu0
  %v2783 = vadd.f32 %v2686, %v2782
  %v2784 = vpop.f32.mrb[0].mxu0
  %2785 = vmatprep.mubr.bf16.mxu0 %v1500
  %2786 = vmatmul.mubr.bf16.gmra.mrb[0].mxu0 %v1499
  %v2787 = vpop.f32.mrb[0].mxu0
  %v2788 = vadd.f32 %v2691, %v2787
  %v2789 = vpop.f32.mrb[0].mxu0
  %v2790 = vpop.f32.mrb[0].mxu0
  %v2791 = vadd.f32 %v2694, %v2790
  %v2792 = vpop.f32.mrb[0].mxu0
  %2793 = vmatprep.mubr.bf16.mxu0 %v1524
  %2794 = vmatmul.mubr.bf16.gmra.mrb[0].mxu0 %v1523
  %v2795 = vpop.f32.mrb[0].mxu0
  %v2796 = vadd.f32 %v2699, %v2795
  %v2797 = vpop.f32.mrb[0].mxu0
  %v2798 = vpop.f32.mrb[0].mxu0
  %v2799 = vadd.f32 %v2702, %v2798
  %v2800 = vpop.f32.mrb[0].mxu0
  %2801 = vmatprep.mubr.bf16.mxu0 %v1548
  %2802 = vmatmul.mubr.bf16.gmra.mrb[0].mxu0 %v1547
  %v2803 = vpop.f32.mrb[0].mxu0
  %v2804 = vadd.f32 %v2707, %v2803
  %v2805 = vpop.f32.mrb[0].mxu0
  %v2806 = vpop.f32.mrb[0].mxu0
  %v2807 = vadd.f32 %v2710, %v2806
  %v2808 = vpop.f32.mrb[0].mxu0
  %2809 = vdwg.mxu0
  %2810 = vmatprep.subr.bf16.mxu0 0
  %2811 = vmatpush1.bf16.msra.mxu0 %v575
  %2812 = vmatprep.subr.bf16.mxu0 0
  %2813 = vmatpush1.bf16.msra.mxu0 %v576
  %2814 = vmatprep.subr.bf16.mxu0 0
  %2815 = vmatpush1.bf16.msra.mxu0 %v577
  %2816 = vmatprep.subr.bf16.mxu0 0
  %2817 = vmatpush1.bf16.msra.mxu0 %v578
  %2818 = vmatprep.subr.bf16.mxu0 0
  %2819 = vmatpush1.bf16.msra.mxu0 %v579
  %2820 = vmatprep.subr.bf16.mxu0 0
  %2821 = vmatpush1.bf16.msra.mxu0 %v580
  %2822 = vmatprep.subr.bf16.mxu0 0
  %2823 = vmatpush1.bf16.msra.mxu0 %v581
  %2824 = vmatprep.subr.bf16.mxu0 0
  %2825 = vmatpush1.bf16.msra.mxu0 %v582
  %2826 = vmatprep.subr.bf16.mxu0 0
  %2827 = vmatpush1.bf16.msra.mxu0 %v583
  %2828 = vmatprep.subr.bf16.mxu0 0
  %2829 = vmatpush1.bf16.msra.mxu0 %v584
  %2830 = vmatprep.subr.bf16.mxu0 0
  %2831 = vmatpush1.bf16.msra.mxu0 %v585
  %2832 = vmatprep.subr.bf16.mxu0 0
  %2833 = vmatpush1.bf16.msra.mxu0 %v586
  %2834 = vmatprep.subr.bf16.mxu0 0
  %2835 = vmatpush1.bf16.msra.mxu0 %v587
  %2836 = vmatprep.subr.bf16.mxu0 0
  %2837 = vmatpush1.bf16.msra.mxu0 %v588
  %2838 = vmatprep.subr.bf16.mxu0 0
  %2839 = vmatpush1.bf16.msra.mxu0 %v589
  %2840 = vmatprep.subr.bf16.mxu0 0
  %2841 = vmatpush1.bf16.msra.mxu0 %v590
  %2842 = vmatprep.mubr.bf16.mxu0 %v1382
  %2843 = vmatmul.mubr.bf16.gmra.mrb[0].mxu0 %v1381
  %v2844 = vpop.f32.mrb[0].mxu0
  %v2845 = vadd.f32 %v2748, %v2844
  %v2846 = vpop.f32.mrb[0].mxu0
  %v2847 = vpop.f32.mrb[0].mxu0
  %v2848 = vadd.f32 %v2751, %v2847
  %v2849 = vpop.f32.mrb[0].mxu0
  %2850 = vmatprep.mubr.bf16.mxu0 %v1406
  %2851 = vmatmul.mubr.bf16.gmra.mrb[0].mxu0 %v1405
  %v2852 = vpop.f32.mrb[0].mxu0
  %v2853 = vadd.f32 %v2756, %v2852
  %v2854 = vpop.f32.mrb[0].mxu0
  %v2855 = vpop.f32.mrb[0].mxu0
  %v2856 = vadd.f32 %v2759, %v2855
  %v2857 = vpop.f32.mrb[0].mxu0
  %2858 = vmatprep.mubr.bf16.mxu0 %v1430
  %2859 = vmatmul.mubr.bf16.gmra.mrb[0].mxu0 %v1429
  %v2860 = vpop.f32.mrb[0].mxu0
  %v2861 = vadd.f32 %v2764, %v2860
  %v2862 = vpop.f32.mrb[0].mxu0
  %v2863 = vpop.f32.mrb[0].mxu0
  %v2864 = vadd.f32 %v2767, %v2863
  %v2865 = vpop.f32.mrb[0].mxu0
  %2866 = vmatprep.mubr.bf16.mxu0 %v1454
  %2867 = vmatmul.mubr.bf16.gmra.mrb[0].mxu0 %v1453
  %v2868 = vpop.f32.mrb[0].mxu0
  %v2869 = vadd.f32 %v2772, %v2868
  %v2870 = vpop.f32.mrb[0].mxu0
  %v2871 = vpop.f32.mrb[0].mxu0
  %v2872 = vadd.f32 %v2775, %v2871
  %v2873 = vpop.f32.mrb[0].mxu0
  %2874 = vmatprep.mubr.bf16.mxu0 %v1478
  %2875 = vmatmul.mubr.bf16.gmra.mrb[0].mxu0 %v1477
  %v2876 = vpop.f32.mrb[0].mxu0
  %v2877 = vadd.f32 %v2780, %v2876
  %v2878 = vpop.f32.mrb[0].mxu0
  %v2879 = vpop.f32.mrb[0].mxu0
  %v2880 = vadd.f32 %v2783, %v2879
  %v2881 = vpop.f32.mrb[0].mxu0
  %2882 = vmatprep.mubr.bf16.mxu0 %v1502
  %2883 = vmatmul.mubr.bf16.gmra.mrb[0].mxu0 %v1501
  %v2884 = vpop.f32.mrb[0].mxu0
  %v2885 = vadd.f32 %v2788, %v2884
  %v2886 = vpop.f32.mrb[0].mxu0
  %v2887 = vpop.f32.mrb[0].mxu0
  %v2888 = vadd.f32 %v2791, %v2887
  %v2889 = vpop.f32.mrb[0].mxu0
  %2890 = vmatprep.mubr.bf16.mxu0 %v1526
  %2891 = vmatmul.mubr.bf16.gmra.mrb[0].mxu0 %v1525
  %v2892 = vpop.f32.mrb[0].mxu0
  %v2893 = vadd.f32 %v2796, %v2892
  %v2894 = vpop.f32.mrb[0].mxu0
  %v2895 = vpop.f32.mrb[0].mxu0
  %v2896 = vadd.f32 %v2799, %v2895
  %v2897 = vpop.f32.mrb[0].mxu0
  %2898 = vmatprep.mubr.bf16.mxu0 %v1550
  %2899 = vmatmul.mubr.bf16.gmra.mrb[0].mxu0 %v1549
  %v2900 = vpop.f32.mrb[0].mxu0
  %v2901 = vadd.f32 %v2804, %v2900
  %v2902 = vpop.f32.mrb[0].mxu0
  %v2903 = vpop.f32.mrb[0].mxu0
  %v2904 = vadd.f32 %v2807, %v2903
  %v2905 = vpop.f32.mrb[0].mxu0
  %2906 = vdwg.mxu0
  %vm2907 = vcmask 400384
  %v2908 = vsel %vm2907, %v2845, 0.0
  %2909 = vadd.xlane.f32.xlu0 %v2908
  %v2910 = vpop.xlane.xlu0 %2909
  %v2911 = vsel %vm2907, %v2848, 0.0
  %2912 = vadd.xlane.f32.xlu0 %v2911
  %v2913 = vpop.xlane.xlu0 %2912
  %v2914 = vsel %vm2907, %v2853, 0.0
  %2915 = vadd.xlane.f32.xlu0 %v2914
  %v2916 = vpop.xlane.xlu0 %2915
  %v2917 = vsel %vm2907, %v2856, 0.0
  %2918 = vadd.xlane.f32.xlu0 %v2917
  %v2919 = vpop.xlane.xlu0 %2918
  %v2920 = vsel %vm2907, %v2861, 0.0
  %2921 = vadd.xlane.f32.xlu0 %v2920
  %v2922 = vpop.xlane.xlu0 %2921
  %v2923 = vsel %vm2907, %v2864, 0.0
  %2924 = vadd.xlane.f32.xlu0 %v2923
  %v2925 = vpop.xlane.xlu0 %2924
  %v2926 = vsel %vm2907, %v2869, 0.0
  %2927 = vadd.xlane.f32.xlu0 %v2926
  %v2928 = vpop.xlane.xlu0 %2927
  %v2929 = vsel %vm2907, %v2872, 0.0
  %2930 = vadd.xlane.f32.xlu0 %v2929
  %v2931 = vpop.xlane.xlu0 %2930
  %v2932 = vsel %vm2907, %v2877, 0.0
  %2933 = vadd.xlane.f32.xlu0 %v2932
  %v2934 = vpop.xlane.xlu0 %2933
  %v2935 = vsel %vm2907, %v2880, 0.0
  %2936 = vadd.xlane.f32.xlu0 %v2935
  %v2937 = vpop.xlane.xlu0 %2936
  %v2938 = vsel %vm2907, %v2885, 0.0
  %2939 = vadd.xlane.f32.xlu0 %v2938
  %v2940 = vpop.xlane.xlu0 %2939
  %v2941 = vsel %vm2907, %v2888, 0.0
  %2942 = vadd.xlane.f32.xlu0 %v2941
  %v2943 = vpop.xlane.xlu0 %2942
  %v2944 = vsel %vm2907, %v2893, 0.0
  %2945 = vadd.xlane.f32.xlu0 %v2944
  %v2946 = vpop.xlane.xlu0 %2945
  %v2947 = vsel %vm2907, %v2896, 0.0
  %2948 = vadd.xlane.f32.xlu0 %v2947
  %v2949 = vpop.xlane.xlu0 %2948
  %v2950 = vsel %vm2907, %v2901, 0.0
  %2951 = vadd.xlane.f32.xlu0 %v2950
  %v2952 = vpop.xlane.xlu0 %2951
  %v2953 = vsel %vm2907, %v2904, 0.0
  %2954 = vadd.xlane.f32.xlu0 %v2953
  %v2955 = vpop.xlane.xlu0 %2954
  %v2956 = vmul.f32 %v2910, 0.020408163
  %v2957 = vmul.f32 %v2913, 0.020408163
  %v2958 = vmul.f32 %v2916, 0.020408163
  %v2959 = vmul.f32 %v2919, 0.020408163
  %v2960 = vmul.f32 %v2922, 0.020408163
  %v2961 = vmul.f32 %v2925, 0.020408163
  %v2962 = vmul.f32 %v2928, 0.020408163
  %v2963 = vmul.f32 %v2931, 0.020408163
  %v2964 = vmul.f32 %v2934, 0.020408163
  %v2965 = vmul.f32 %v2937, 0.020408163
  %v2966 = vmul.f32 %v2940, 0.020408163
  %v2967 = vmul.f32 %v2943, 0.020408163
  %v2968 = vmul.f32 %v2946, 0.020408163
  %v2969 = vmul.f32 %v2949, 0.020408163
  %v2970 = vmul.f32 %v2952, 0.020408163
  %v2971 = vmul.f32 %v2955, 0.020408163
  %v2972 = vld [vmem:[%s2] sm:$0xff]
  %v2973 = vld [vmem:[%s2 + $0x8] sm:$0xff]
  %v2974 = vld [vmem:[%s2 + $0x10] sm:$0xff]
  %v2975 = vld [vmem:[%s2 + $0x18] sm:$0xff]
  %v2976 = vld [vmem:[%s2 + $0x20] sm:$0xff]
  %v2977 = vld [vmem:[%s2 + $0x28] sm:$0xff]
  %v2978 = vld [vmem:[%s2 + $0x30] sm:$0xff]
  %v2979 = vld [vmem:[%s2 + $0x38] sm:$0xff]
  %v2980 = vld [vmem:[%s2 + $0x40] sm:$0xff]
  %v2981 = vld [vmem:[%s2 + $0x48] sm:$0xff]
  %v2982 = vld [vmem:[%s2 + $0x50] sm:$0xff]
  %v2983 = vld [vmem:[%s2 + $0x58] sm:$0xff]
  %v2984 = vld [vmem:[%s2 + $0x60] sm:$0xff]
  %v2985 = vld [vmem:[%s2 + $0x68] sm:$0xff]
  %v2986 = vld [vmem:[%s2 + $0x70] sm:$0xff]
  %v2987 = vld [vmem:[%s2 + $0x78] sm:$0xff]
  %v2988 = vadd.f32 %v2956, %v2972
  %v2989 = vadd.f32 %v2957, %v2973
  %v2990 = vadd.f32 %v2958, %v2974
  %v2991 = vadd.f32 %v2959, %v2975
  %v2992 = vadd.f32 %v2960, %v2976
  %v2993 = vadd.f32 %v2961, %v2977
  %v2994 = vadd.f32 %v2962, %v2978
  %v2995 = vadd.f32 %v2963, %v2979
  %v2996 = vadd.f32 %v2964, %v2980
  %v2997 = vadd.f32 %v2965, %v2981
  %v2998 = vadd.f32 %v2966, %v2982
  %v2999 = vadd.f32 %v2967, %v2983
  %v3000 = vadd.f32 %v2968, %v2984
  %v3001 = vadd.f32 %v2969, %v2985
  %v3002 = vadd.f32 %v2970, %v2986
  %v3003 = vadd.f32 %v2971, %v2987
  %vm3004 = vcmask 7168
  %3005 = vst.msk [vmem:[%s3] sm:$0xff] %vm3004, %v2988
  %3006 = vst.msk [vmem:[%s3 + $0x8] sm:$0xff] %vm3004, %v2989
  %3007 = vst.msk [vmem:[%s3 + $0x10] sm:$0xff] %vm3004, %v2990
  %3008 = vst.msk [vmem:[%s3 + $0x18] sm:$0xff] %vm3004, %v2991
  %3009 = vst.msk [vmem:[%s3 + $0x20] sm:$0xff] %vm3004, %v2992
  %3010 = vst.msk [vmem:[%s3 + $0x28] sm:$0xff] %vm3004, %v2993
  %3011 = vst.msk [vmem:[%s3 + $0x30] sm:$0xff] %vm3004, %v2994
  %3012 = vst.msk [vmem:[%s3 + $0x38] sm:$0xff] %vm3004, %v2995
  %3013 = vst.msk [vmem:[%s3 + $0x40] sm:$0xff] %vm3004, %v2996
  %3014 = vst.msk [vmem:[%s3 + $0x48] sm:$0xff] %vm3004, %v2997
  %3015 = vst.msk [vmem:[%s3 + $0x50] sm:$0xff] %vm3004, %v2998
  %3016 = vst.msk [vmem:[%s3 + $0x58] sm:$0xff] %vm3004, %v2999
  %3017 = vst.msk [vmem:[%s3 + $0x60] sm:$0xff] %vm3004, %v3000
  %3018 = vst.msk [vmem:[%s3 + $0x68] sm:$0xff] %vm3004, %v3001
  %3019 = vst.msk [vmem:[%s3 + $0x70] sm:$0xff] %vm3004, %v3002
  %3020 = vst.msk [vmem:[%s3 + $0x78] sm:$0xff] %vm3004, %v3003
  // Predicated region
  $region14: #{mean_conv2d_1x1.1} parent=0 // pred_check
    _
  $region15: #{mean_conv2d_1x1.1} parent=0 // pred_check_branch
    %3022 = sbr.rel (0) target = $region17
  $region16: #{mean_conv2d_1x1.1} parent=0 // pred_region
    _
  $region17: #{mean_conv2d_1x1.1} parent=0 // pred_fallthru
    _
  // Predicated region
  $region18: #{mean_conv2d_1x1.1} parent=0 // pred_check
    _
  $region19: #{mean_conv2d_1x1.1} parent=0 // pred_check_branch
    %3024 = sbr.rel (0) target = $region21
  $region20: #{mean_conv2d_1x1.1} parent=0 // pred_region
    _
  $region21: #{mean_conv2d_1x1.1} parent=0 // pred_fallthru
    _

</llo_original>
